<compile_context>
chip_gen: v6e
topology: v6e:2x2x1
jax: 0.10.0
libtpu: 0.0.40
codegen_flags: <defaults>
</compile_context>

<pallas_src>
import functools

import jax
import jax.numpy as jnp
from jax import lax
from jax.experimental import pallas as pl
from jax.experimental.pallas import tpu as pltpu

_LANE = 128


def _round_up(v, m):
    return (v + m - 1) // m * m


def _bn_fold(gamma, beta, mean, var, eps=1e-5):
    scale = gamma / jnp.sqrt(var + eps)
    bias = beta - mean * scale
    return scale, bias


def _pad2(a, rows, cols):
    return jnp.pad(a, ((0, rows - a.shape[0]), (0, cols - a.shape[1])))


def _pad1(v, n):
    return jnp.pad(v, (0, n - v.shape[0]))


def _vmem_cap_bytes():
    """Per-core VMEM capacity (generation aware), conservative fallback."""
    try:
        return int(pltpu.get_tpu_info().vmem_capacity_bytes)
    except Exception:
        return 64 << 20          # v7x-sized conservative default


def _footprint_bytes(tl, cin_p, p_p, cout_p, out_isz, w_copies):
    """Rough VMEM footprint for one grid step (blocks + weights + live temps)."""
    in_blk = (tl * cin_p + 2 * cin_p) * 2                 # bf16 x tile + halo rows
    out_blk = tl * cout_p * out_isz
    w_bytes = (cin_p * p_p + 3 * p_p * p_p + p_p * cout_p) * 2 \
        + (2 * p_p + cout_p) * 4
    act = ((tl + 2) * p_p * (4 + 2)                       # h_ext f32 + bf16 copy
           + tl * 3 * p_p * 2                             # fused 3-tap operand
           + tl * p_p * 4                                 # h2
           + tl * cout_p * 4                              # h3
           + tl * cin_p * 4)                              # f32 identity
    return 2 * (in_blk + out_blk) + w_copies * w_bytes + act


def _auto_l_tile(L, ceiling, budget, cin_p, p_p, cout_p, out_isz, w_copies):
    """Largest divisor of L that is a multiple of 8, <= ceiling, fits budget."""
    best = None
    for d in range(8, min(L, ceiling) + 1, 8):
        if L % d == 0 and _footprint_bytes(d, cin_p, p_p, cout_p, out_isz,
                                           w_copies) <= budget:
            best = d
    return best


# ------------------------------- kernel --------------------------------------

def _bottleneck_kernel(x_ref,     # (TL, Cin_p)   bf16, rows t*TL .. t*TL+TL-1
                       halo_ref,  # (2, Cin_p)    bf16, rows t*TL-1 / t*TL+TL (0 at ends)
                       w1_ref,    # (Cin_p, P_p)  bf16, BN1 scale folded in
                       w2_ref,    # (3*P_p, P_p)  bf16, taps [l-1 | l | l+1], BN2 folded
                       w3_ref,    # (P_p, Cout_p) bf16, BN3 scale folded in
                       b1_ref,    # (1, P_p)      f32
                       b2_ref,    # (1, P_p)      f32
                       b3_ref,    # (1, Cout_p)   f32
                       o_ref):    # (TL, Cout_p)  out dtype
    tl = o_ref.shape[0]
    x_t = x_ref[...]                                            # bf16 (TL, Cin_p)

    # conv1 (1x1) + BN1 bias + ReLU on the halo-extended tile (TL+2 rows).
    x_ext = jnp.concatenate([halo_ref[0:1], x_t, halo_ref[1:2]], axis=0)
    h = jnp.dot(x_ext, w1_ref[...], preferred_element_type=jnp.float32)
    h = jnp.maximum(h + b1_ref[...], 0.0)                       # f32 (TL+2, P_p)

    # conv2's zero padding applies to *h*: zero the halo rows that fall outside
    # the sequence (first/last L-tile only) with two scalar row scales — no
    # full-tile select, interior tiles pay nothing extra beyond the bf16 cast.
    t = pl.program_id(1)
    not_first = (t > 0).astype(jnp.float32)
    not_last = (t < pl.num_programs(1) - 1).astype(jnp.float32)
    hb = jnp.concatenate(
        [h[0:1] * not_first, h[1:tl + 1], h[tl + 1:tl + 2] * not_last],
        axis=0).astype(jnp.bfloat16)                            # bf16 (TL+2, P_p)

    # conv2 (k=3, pad=1) as ONE MXU matmul: [h[l-1] | h[l] | h[l+1]] @ (3P, P).
    # TODO(synk): on v5e consider three accumulating K=P dots instead of the concat.
    h3k = jnp.concatenate([hb[0:tl], hb[1:tl + 1], hb[2:tl + 2]], axis=-1)
    h2 = jnp.dot(h3k, w2_ref[...], preferred_element_type=jnp.float32)
    h2 = jnp.maximum(h2 + b2_ref[...], 0.0)                     # f32 (TL, P_p)

    # conv3 (1x1) + BN3 bias + residual add + ReLU (f32 epilogue).
    h3 = jnp.dot(h2.astype(jnp.bfloat16), w3_ref[...],
                 preferred_element_type=jnp.float32)
    identity = x_t.astype(jnp.float32)        # bf16-quantized skip (documented)
    o_ref[...] = jnp.maximum(h3 + b3_ref[...] + identity, 0.0).astype(o_ref.dtype)


# ------------------------------- wrapper --------------------------------------

@functools.partial(jax.jit,
                   static_argnames=("l_tile", "out_dtype", "single_buffer_weights"))
def _bottleneck_impl(x_ncl, params, *, l_tile, out_dtype, single_buffer_weights):
    (w1, w2, w3,
     g1, be1, m1, v1,
     g2, be2, m2, v2,
     g3, be3, m3, v3) = params

    N, Cin, L = x_ncl.shape
    P = w1.shape[0]
    Cout = w3.shape[0]
    assert Cin == Cout, \
        "identity residual (stride=1, no downsample) needs inplanes == planes*4"

    # Lane-dense channel padding (multiples of 128).
    cin_p = _round_up(Cin, _LANE)
    p_p = _round_up(P, _LANE)
    cout_p = _round_up(Cout, _LANE)
    out_isz = jnp.dtype(out_dtype).itemsize
    w_copies = 1 if single_buffer_weights else 2

    # Generation-aware budgets (v5e/v6e ~128 MiB VMEM, v7x ~64 MiB).
    cap = _vmem_cap_bytes()
    budget = max(cap - (12 << 20), 16 << 20)
    tile_ceiling = 1024 if cap >= (100 << 20) else 512

    if l_tile is None or l_tile % 8 != 0 or L % l_tile != 0:
        l_tile = _auto_l_tile(L, tile_ceiling, budget,
                              cin_p, p_p, cout_p, out_isz, w_copies)
    if l_tile is None:
        # TODO(synk): ragged L (not a multiple of 8) would need output-row masking.
        l_tile = L
    nt = max(L // l_tile, 1)

    # ---- fold BN scale into weights (once at trace time); keep bias only ----
    s1, b1 = _bn_fold(g1, be1, m1, v1)
    s2, b2 = _bn_fold(g2, be2, m2, v2)
    s3, b3 = _bn_fold(g3, be3, m3, v3)

    w1s = _pad2(w1[:, :, 0].T * s1[None, :], cin_p, p_p).astype(jnp.bfloat16)
    w2s = jnp.concatenate(
        [_pad2(w2[:, :, k].T * s2[None, :], p_p, p_p) for k in range(3)],
        axis=0).astype(jnp.bfloat16)                              # (3*P_p, P_p)
    w3s = _pad2(w3[:, :, 0].T * s3[None, :], p_p, cout_p).astype(jnp.bfloat16)

    b1p = _pad1(b1, p_p).reshape(1, p_p).astype(jnp.float32)
    b2p = _pad1(b2, p_p).reshape(1, p_p).astype(jnp.float32)
    b3p = _pad1(b3, cout_p).reshape(1, cout_p).astype(jnp.float32)

    # ---- activations: ONE fused producer (NCL->NLC + channel pad + bf16) ----
    # TODO(synk): keep the surrounding model channels-last (NLC) to drop this
    # transpose entirely; it is the only full HBM pass left outside the kernel.
    x = jnp.transpose(x_ncl, (0, 2, 1))
    x = jnp.pad(x, ((0, 0), (0, 0), (0, cin_p - Cin))).astype(jnp.bfloat16)

    # Tiny per-tile halo side input: rows t*TL-1 and t*TL+TL (zeros at seq ends).
    zero_row = jnp.zeros((N, 1, cin_p), jnp.bfloat16)
    if nt > 1:
        lo = jnp.concatenate([zero_row, x[:, l_tile - 1:L - 1:l_tile, :]], axis=1)
        hi = jnp.concatenate([x[:, l_tile::l_tile, :], zero_row], axis=1)
    else:
        lo, hi = zero_row, zero_row
    halo = jnp.stack([lo, hi], axis=2)                           # (N, nt, 2, Cin_p)

    # ---- VMEM budget & cost estimate --------------------------------------
    vmem_need = _footprint_bytes(l_tile, cin_p, p_p, cout_p, out_isz, w_copies) \
        + (4 << 20)
    vmem_limit = int(min(max(vmem_need, 16 << 20), budget))

    flops = 2 * N * nt * ((l_tile + 2) * cin_p * p_p
                          + l_tile * 3 * p_p * p_p
                          + l_tile * p_p * cout_p)
    bytes_accessed = (N * L * cin_p * 2 + N * nt * 2 * cin_p * 2
                      + N * L * cout_p * out_isz
                      + (cin_p * p_p + 3 * p_p * p_p + p_p * cout_p) * 2
                      + (2 * p_p + cout_p) * 4)
    cost = pl.CostEstimate(flops=int(flops), transcendentals=0,
                           bytes_accessed=int(bytes_accessed))

    # Grid-invariant weights/biases: single-buffer them if supported.
    def wspec(shape):
        if single_buffer_weights:
            return pl.BlockSpec(shape, lambda n, t: (0, 0),
                                pipeline_mode=pl.Buffered(1))
        return pl.BlockSpec(shape, lambda n, t: (0, 0))

    out = pl.pallas_call(
        _bottleneck_kernel,
        out_shape=jax.ShapeDtypeStruct((N, L, cout_p), out_dtype),
        grid_spec=pltpu.PrefetchScalarGridSpec(
            num_scalar_prefetch=0,
            grid=(N, nt),
            in_specs=[
                pl.BlockSpec((None, l_tile, cin_p), lambda n, t: (n, t, 0)),
                pl.BlockSpec((None, None, 2, cin_p), lambda n, t: (n, t, 0, 0)),
                wspec((cin_p, p_p)),
                wspec((3 * p_p, p_p)),
                wspec((p_p, cout_p)),
                wspec((1, p_p)),
                wspec((1, p_p)),
                wspec((1, cout_p)),
            ],
            out_specs=pl.BlockSpec((None, l_tile, cout_p), lambda n, t: (n, t, 0)),
        ),
        compiler_params=pltpu.CompilerParams(
            dimension_semantics=("parallel", "parallel"),
            vmem_limit_bytes=vmem_limit),
        cost_estimate=cost,
    )(x, halo, w1s, w2s, w3s, b1p, b2p, b3p)

    # strip channel padding, NLC -> NCL (PyTorch layout)
    return jnp.transpose(out[:, :, :Cout], (0, 2, 1))


_SINGLE_BUFFER_WEIGHTS = None   # probed once: does this Pallas accept pl.Buffered(1)?


def bottleneck_pallas(x_ncl, params, *, l_tile=None, out_dtype=jnp.float32):
    """x_ncl: (N, C, L) in PyTorch NCL layout.  Returns (N, C, L) in out_dtype."""
    global _SINGLE_BUFFER_WEIGHTS
    if _SINGLE_BUFFER_WEIGHTS is None:
        try:
            out = _bottleneck_impl(x_ncl, params, l_tile=l_tile,
                                   out_dtype=out_dtype, single_buffer_weights=True)
            jax.block_until_ready(out)
            _SINGLE_BUFFER_WEIGHTS = True
            return out
        except Exception:
            _SINGLE_BUFFER_WEIGHTS = False    # fall back to default double-buffering
    return _bottleneck_impl(x_ncl, params, l_tile=l_tile, out_dtype=out_dtype,
                            single_buffer_weights=_SINGLE_BUFFER_WEIGHTS)


# -------------------------- pure-JAX references ------------------------------

def bottleneck_reference_f32(x_ncl, params):
    """Exact f32 inference-mode reference (XLA convs), NCL layout like PyTorch."""
    (w1, w2, w3,
     g1, be1, m1, v1,
     g2, be2, m2, v2,
     g3, be3, m3, v3) = params

    def bn(y, g, b, m, v):
        s, bi = _bn_fold(g, b, m, v)
        return y * s[None, :, None] + bi[None, :, None]

    dn = ('NCH', 'OIH', 'NCH')
    out = lax.conv_general_dilated(x_ncl, w1, (1,), 'VALID', dimension_numbers=dn)
    out = jax.nn.relu(bn(out, g1, be1, m1, v1))
    out = lax.conv_general_dilated(out, w2, (1,), [(1, 1)], dimension_numbers=dn)
    out = jax.nn.relu(bn(out, g2, be2, m2, v2))
    out = lax.conv_general_dilated(out, w3, (1,), 'VALID', dimension_numbers=dn)
    out = bn(out, g3, be3, m3, v3)
    return jax.nn.relu(out + x_ncl)


def bottleneck_reference_bf16(x_ncl, params):
    """Mirror of the kernel's bf16-operand / f32-accumulate math (tight check)."""
    (w1, w2, w3,
     g1, be1, m1, v1,
     g2, be2, m2, v2,
     g3, be3, m3, v3) = params

    q = lambda a: a.astype(jnp.bfloat16).astype(jnp.float32)
    s1, b1 = _bn_fold(g1, be1, m1, v1)
    s2, b2 = _bn_fold(g2, be2, m2, v2)
    s3, b3 = _bn_fold(g3, be3, m3, v3)

    x = q(jnp.transpose(x_ncl, (0, 2, 1)))                         # (N, L, Cin)
    w1s = q(w1[:, :, 0].T * s1[None, :])
    w2s = q(jnp.concatenate([w2[:, :, k].T for k in range(3)], axis=0) * s2[None, :])
    w3s = q(w3[:, :, 0].T * s3[None, :])

    h = jnp.maximum(jnp.einsum('nlc,cp->nlp', x, w1s) + b1[None, None, :], 0.0)
    hq = q(h)
    hp = jnp.pad(hq, ((0, 0), (1, 1), (0, 0)))
    h3k = jnp.concatenate([hp[:, :-2], hp[:, 1:-1], hp[:, 2:]], axis=-1)
    h2 = jnp.maximum(jnp.einsum('nlk,kp->nlp', h3k, w2s) + b2[None, None, :], 0.0)
    h3 = jnp.einsum('nlp,pc->nlc', q(h2), w3s) + b3[None, None, :]
    out = jnp.maximum(h3 + x, 0.0)
    return jnp.transpose(out, (0, 2, 1))


def init_params(key, inplanes, planes):
    expansion = 4
    cout = planes * expansion
    ks = jax.random.split(key, 15)
    w1 = jax.random.normal(ks[0], (planes, inplanes, 1), jnp.float32) * 0.1
    w2 = jax.random.normal(ks[1], (planes, planes, 3), jnp.float32) * 0.1
    w3 = jax.random.normal(ks[2], (cout, planes, 1), jnp.float32) * 0.1
    g1 = jax.random.uniform(ks[3], (planes,), jnp.float32, 0.5, 1.5)
    be1 = jax.random.normal(ks[4], (planes,), jnp.float32) * 0.1
    m1 = jax.random.normal(ks[5], (planes,), jnp.float32) * 0.1
    v1 = jax.random.uniform(ks[6], (planes,), jnp.float32, 0.5, 1.5)
    g2 = jax.random.uniform(ks[7], (planes,), jnp.float32, 0.5, 1.5)
    be2 = jax.random.normal(ks[8], (planes,), jnp.float32) * 0.1
    m2 = jax.random.normal(ks[9], (planes,), jnp.float32) * 0.1
    v2 = jax.random.uniform(ks[10], (planes,), jnp.float32, 0.5, 1.5)
    g3 = jax.random.uniform(ks[11], (cout,), jnp.float32, 0.5, 1.5)
    be3 = jax.random.normal(ks[12], (cout,), jnp.float32) * 0.1
    m3 = jax.random.normal(ks[13], (cout,), jnp.float32) * 0.1
    v3 = jax.random.uniform(ks[14], (cout,), jnp.float32, 0.5, 1.5)
    return (w1, w2, w3,
            g1, be1, m1, v1,
            g2, be2, m2, v2,
            g3, be3, m3, v3)


if __name__ == "__main__":
    key = jax.random.PRNGKey(0)
    kx, kp = jax.random.split(key)

    N, L = 2, 16
    planes = 4
    inplanes = planes * 4            # stride=1 & downsample=None => identity must match

    x = jax.random.normal(kx, (N, inplanes, L), jnp.float32)   # PyTorch NCL layout
    params = init_params(kp, inplanes, planes)

    out = bottleneck_pallas(x, params, l_tile=8)               # 2 L-tiles -> grid (2, 2)
    out = jax.block_until_ready(out)
    assert out.shape == (N, inplanes, L)

    # Tight check against a pure-JAX mirror of the kernel's bf16/f32 math.
    ref_q = bottleneck_reference_bf16(x, params)
    err_q = float(jnp.max(jnp.abs(out - ref_q)))
    assert jnp.allclose(out, ref_q, atol=1e-4, rtol=1e-4), err_q

    # Sanity check against the exact f32 PyTorch-equivalent reference
    # (looser tolerance because matmul operands are bf16-quantized).
    ref_f = bottleneck_reference_f32(x, params)
    err_f = float(jnp.max(jnp.abs(out - ref_f)))
    assert jnp.allclose(out, ref_f, atol=5e-2, rtol=5e-2), err_f

    # Exercise the bf16 output path (for chaining into a following conv block).
    out_bf16 = bottleneck_pallas(x, params, l_tile=8, out_dtype=jnp.bfloat16)
    out_bf16 = jax.block_until_ready(out_bf16)
    assert out_bf16.shape == (N, inplanes, L) and out_bf16.dtype == jnp.bfloat16
    assert float(jnp.max(jnp.abs(out_bf16.astype(jnp.float32) - out))) < 0.1

    print("KERNEL_OK")
</pallas_src>

<mosaic_0001>
module attributes {stable_mosaic.version = 11 : i64} {
  func.func @_bottleneck_kernel(%arg0: i32, %arg1: i32, %arg2: memref<1x8x128xbf16, #tpu.memory_space<vmem>>, %arg3: memref<1x1x2x128xbf16, #tpu.memory_space<vmem>>, %arg4: memref<128x128xbf16, #tpu.memory_space<vmem>>, %arg5: memref<384x128xbf16, #tpu.memory_space<vmem>>, %arg6: memref<128x128xbf16, #tpu.memory_space<vmem>>, %arg7: memref<1x128xf32, #tpu.memory_space<vmem>>, %arg8: memref<1x128xf32, #tpu.memory_space<vmem>>, %arg9: memref<1x128xf32, #tpu.memory_space<vmem>>, %arg10: memref<1x8x128xf32, #tpu.memory_space<vmem>>) attributes {dimension_semantics = [#tpu.dimension_semantics<parallel>, #tpu.dimension_semantics<parallel>], iteration_bounds = array<i64: 2, 2>, scalar_prefetch = 0 : i64, scratch_operands = 0 : i64, tpu.core_type = #tpu.core_type<tc>, window_params = [{transform_indices = @transform_0, window_bounds = array<i64: 1, 8, 128>}, {transform_indices = @transform_1, window_bounds = array<i64: 1, 1, 2, 128>}, {pipeline_mode = #tpu.pipeline_mode<synchronous>, transform_indices = @transform_2, window_bounds = array<i64: 128, 128>}, {pipeline_mode = #tpu.pipeline_mode<synchronous>, transform_indices = @transform_3, window_bounds = array<i64: 384, 128>}, {pipeline_mode = #tpu.pipeline_mode<synchronous>, transform_indices = @transform_4, window_bounds = array<i64: 128, 128>}, {pipeline_mode = #tpu.pipeline_mode<synchronous>, transform_indices = @transform_5, window_bounds = array<i64: 1, 128>}, {pipeline_mode = #tpu.pipeline_mode<synchronous>, transform_indices = @transform_6, window_bounds = array<i64: 1, 128>}, {pipeline_mode = #tpu.pipeline_mode<synchronous>, transform_indices = @transform_7, window_bounds = array<i64: 1, 128>}, {transform_indices = @transform_8, window_bounds = array<i64: 1, 8, 128>}]} {
    %c0 = arith.constant 0 : index
    %c0_0 = arith.constant 0 : index
    %c0_1 = arith.constant 0 : index
    %0 = vector.load %arg2[%c0, %c0_0, %c0_1] : memref<1x8x128xbf16, #tpu.memory_space<vmem>>, vector<1x8x128xbf16>
    %1 = vector.shape_cast %0 : vector<1x8x128xbf16> to vector<8x128xbf16>
    %c0_2 = arith.constant 0 : index
    %c0_3 = arith.constant 0 : index
    %c0_4 = arith.constant 0 : index
    %c0_5 = arith.constant 0 : index
    %2 = vector.load %arg3[%c0_2, %c0_3, %c0_4, %c0_5] : memref<1x1x2x128xbf16, #tpu.memory_space<vmem>>, vector<1x1x1x128xbf16>
    %3 = vector.shape_cast %2 : vector<1x1x1x128xbf16> to vector<1x128xbf16>
    %c0_6 = arith.constant 0 : index
    %c0_7 = arith.constant 0 : index
    %c1 = arith.constant 1 : index
    %c0_8 = arith.constant 0 : index
    %4 = vector.load %arg3[%c0_6, %c0_7, %c1, %c0_8] : memref<1x1x2x128xbf16, #tpu.memory_space<vmem>>, vector<1x1x1x128xbf16>
    %5 = vector.shape_cast %4 : vector<1x1x1x128xbf16> to vector<1x128xbf16>
    %6 = tpu.concatenate %3, %1, %5 in 0 : vector<1x128xbf16>, vector<8x128xbf16>, vector<1x128xbf16> -> vector<10x128xbf16>
    %c0_9 = arith.constant 0 : index
    %c0_10 = arith.constant 0 : index
    %7 = vector.load %arg4[%c0_9, %c0_10] : memref<128x128xbf16, #tpu.memory_space<vmem>>, vector<128x128xbf16>
    %cst = arith.constant dense<0.000000e+00> : vector<10x128xf32>
    %8 = tpu.matmul %6, %7, %cst {dimension_numbers = #tpu.dot_dimension_numbers<[1], [0], [0], [1], [0, 0, 1, 1], [], []>} : vector<10x128xbf16>, vector<128x128xbf16>, vector<10x128xf32> -> vector<10x128xf32>
    %c0_11 = arith.constant 0 : index
    %c0_12 = arith.constant 0 : index
    %9 = vector.load %arg7[%c0_11, %c0_12] : memref<1x128xf32, #tpu.memory_space<vmem>>, vector<1x128xf32>
    %10 = vector.broadcast %9 : vector<1x128xf32> to vector<10x128xf32>
    %11 = arith.addf %8, %10 : vector<10x128xf32>
    %cst_13 = arith.constant 0.000000e+00 : f32
    %12 = vector.broadcast %cst_13 : f32 to vector<10x128xf32>
    %13 = arith.maximumf %11, %12 : vector<10x128xf32>
    %c0_i32 = arith.constant 0 : i32
    %14 = arith.cmpi sgt, %arg1, %c0_i32 : i32
    %15 = arith.extui %14 : i1 to i32
    %16 = arith.sitofp %15 : i32 to f32
    %c1_i32 = arith.constant 1 : i32
    %17 = arith.cmpi slt, %arg1, %c1_i32 : i32
    %18 = arith.extui %17 : i1 to i32
    %19 = arith.sitofp %18 : i32 to f32
    %20 = vector.extract_strided_slice %13 {offsets = [0, 0], sizes = [1, 128], strides = [1, 1]} : vector<10x128xf32> to vector<1x128xf32>
    %21 = vector.broadcast %16 : f32 to vector<1x128xf32>
    %22 = arith.mulf %20, %21 : vector<1x128xf32>
    %23 = vector.extract_strided_slice %13 {offsets = [1, 0], sizes = [8, 128], strides = [1, 1]} : vector<10x128xf32> to vector<8x128xf32>
    %24 = vector.extract_strided_slice %13 {offsets = [9, 0], sizes = [1, 128], strides = [1, 1]} : vector<10x128xf32> to vector<1x128xf32>
    %25 = vector.broadcast %19 : f32 to vector<1x128xf32>
    %26 = arith.mulf %24, %25 : vector<1x128xf32>
    %27 = tpu.concatenate %22, %23, %26 in 0 : vector<1x128xf32>, vector<8x128xf32>, vector<1x128xf32> -> vector<10x128xf32>
    %28 = arith.truncf %27 : vector<10x128xf32> to vector<10x128xbf16>
    %29 = vector.extract_strided_slice %28 {offsets = [0, 0], sizes = [8, 128], strides = [1, 1]} : vector<10x128xbf16> to vector<8x128xbf16>
    %30 = vector.extract_strided_slice %28 {offsets = [1, 0], sizes = [8, 128], strides = [1, 1]} : vector<10x128xbf16> to vector<8x128xbf16>
    %31 = vector.extract_strided_slice %28 {offsets = [2, 0], sizes = [8, 128], strides = [1, 1]} : vector<10x128xbf16> to vector<8x128xbf16>
    %32 = tpu.concatenate %29, %30, %31 in 1 : vector<8x128xbf16>, vector<8x128xbf16>, vector<8x128xbf16> -> vector<8x384xbf16>
    %c0_14 = arith.constant 0 : index
    %c0_15 = arith.constant 0 : index
    %33 = vector.load %arg5[%c0_14, %c0_15] : memref<384x128xbf16, #tpu.memory_space<vmem>>, vector<384x128xbf16>
    %cst_16 = arith.constant dense<0.000000e+00> : vector<8x128xf32>
    %34 = tpu.matmul %32, %33, %cst_16 {dimension_numbers = #tpu.dot_dimension_numbers<[1], [0], [0], [1], [0, 0, 1, 1], [], []>} : vector<8x384xbf16>, vector<384x128xbf16>, vector<8x128xf32> -> vector<8x128xf32>
    %c0_17 = arith.constant 0 : index
    %c0_18 = arith.constant 0 : index
    %35 = vector.load %arg8[%c0_17, %c0_18] : memref<1x128xf32, #tpu.memory_space<vmem>>, vector<1x128xf32>
    %36 = vector.broadcast %35 : vector<1x128xf32> to vector<8x128xf32>
    %37 = arith.addf %34, %36 : vector<8x128xf32>
    %cst_19 = arith.constant 0.000000e+00 : f32
    %38 = vector.broadcast %cst_19 : f32 to vector<8x128xf32>
    %39 = arith.maximumf %37, %38 : vector<8x128xf32>
    %40 = arith.truncf %39 : vector<8x128xf32> to vector<8x128xbf16>
    %c0_20 = arith.constant 0 : index
    %c0_21 = arith.constant 0 : index
    %41 = vector.load %arg6[%c0_20, %c0_21] : memref<128x128xbf16, #tpu.memory_space<vmem>>, vector<128x128xbf16>
    %cst_22 = arith.constant dense<0.000000e+00> : vector<8x128xf32>
    %42 = tpu.matmul %40, %41, %cst_22 {dimension_numbers = #tpu.dot_dimension_numbers<[1], [0], [0], [1], [0, 0, 1, 1], [], []>} : vector<8x128xbf16>, vector<128x128xbf16>, vector<8x128xf32> -> vector<8x128xf32>
    %43 = arith.extf %1 : vector<8x128xbf16> to vector<8x128xf32>
    %c0_23 = arith.constant 0 : index
    %c0_24 = arith.constant 0 : index
    %44 = vector.load %arg9[%c0_23, %c0_24] : memref<1x128xf32, #tpu.memory_space<vmem>>, vector<1x128xf32>
    %45 = vector.broadcast %44 : vector<1x128xf32> to vector<8x128xf32>
    %46 = arith.addf %42, %45 : vector<8x128xf32>
    %47 = arith.addf %46, %43 : vector<8x128xf32>
    %cst_25 = arith.constant 0.000000e+00 : f32
    %48 = vector.broadcast %cst_25 : f32 to vector<8x128xf32>
    %49 = arith.maximumf %47, %48 : vector<8x128xf32>
    %c0_26 = arith.constant 0 : index
    %c0_27 = arith.constant 0 : index
    %c0_28 = arith.constant 0 : index
    %50 = vector.load %arg10[%c0_26, %c0_27, %c0_28] : memref<1x8x128xf32, #tpu.memory_space<vmem>>, vector<1x8x128xf32>
    %51 = vector.shape_cast %50 : vector<1x8x128xf32> to vector<8x128xf32>
    %52 = vector.shape_cast %49 : vector<8x128xf32> to vector<1x8x128xf32>
    tpu.vector_store %arg10[%c0_26, %c0_27, %c0_28], %52 {strides = array<i32>} : memref<1x8x128xf32, #tpu.memory_space<vmem>>, vector<1x8x128xf32>,
    return
  }
  func.func @transform_0(%arg0: i32, %arg1: i32) -> (i32, i32, i32) {
    %c0_i32 = arith.constant 0 : i32
    %c0_i32_0 = arith.constant 0 : i32
    return %arg0, %arg1, %c0_i32 : i32, i32, i32
  }
  func.func @transform_1(%arg0: i32, %arg1: i32) -> (i32, i32, i32, i32) {
    %c0_i32 = arith.constant 0 : i32
    %c0_i32_0 = arith.constant 0 : i32
    %c0_i32_1 = arith.constant 0 : i32
    return %arg0, %arg1, %c0_i32, %c0_i32_0 : i32, i32, i32, i32
  }
  func.func @transform_2(%arg0: i32, %arg1: i32) -> (i32, i32) {
    %c0_i32 = arith.constant 0 : i32
    %c0_i32_0 = arith.constant 0 : i32
    %c0_i32_1 = arith.constant 0 : i32
    return %c0_i32, %c0_i32_0 : i32, i32
  }
  func.func @transform_3(%arg0: i32, %arg1: i32) -> (i32, i32) {
    %c0_i32 = arith.constant 0 : i32
    %c0_i32_0 = arith.constant 0 : i32
    %c0_i32_1 = arith.constant 0 : i32
    return %c0_i32, %c0_i32_0 : i32, i32
  }
  func.func @transform_4(%arg0: i32, %arg1: i32) -> (i32, i32) {
    %c0_i32 = arith.constant 0 : i32
    %c0_i32_0 = arith.constant 0 : i32
    %c0_i32_1 = arith.constant 0 : i32
    return %c0_i32, %c0_i32_0 : i32, i32
  }
  func.func @transform_5(%arg0: i32, %arg1: i32) -> (i32, i32) {
    %c0_i32 = arith.constant 0 : i32
    %c0_i32_0 = arith.constant 0 : i32
    %c0_i32_1 = arith.constant 0 : i32
    return %c0_i32, %c0_i32_0 : i32, i32
  }
  func.func @transform_6(%arg0: i32, %arg1: i32) -> (i32, i32) {
    %c0_i32 = arith.constant 0 : i32
    %c0_i32_0 = arith.constant 0 : i32
    %c0_i32_1 = arith.constant 0 : i32
    return %c0_i32, %c0_i32_0 : i32, i32
  }
  func.func @transform_7(%arg0: i32, %arg1: i32) -> (i32, i32) {
    %c0_i32 = arith.constant 0 : i32
    %c0_i32_0 = arith.constant 0 : i32
    %c0_i32_1 = arith.constant 0 : i32
    return %c0_i32, %c0_i32_0 : i32, i32
  }
  func.func @transform_8(%arg0: i32, %arg1: i32) -> (i32, i32, i32) {
    %c0_i32 = arith.constant 0 : i32
    %c0_i32_0 = arith.constant 0 : i32
    return %arg0, %arg1, %c0_i32 : i32, i32, i32
  }
}

module attributes {stable_mosaic.version = 11 : i64} {
  func.func @_bottleneck_kernel(%arg0: i32, %arg1: i32, %arg2: memref<1x8x128xbf16, #tpu.memory_space<vmem>>, %arg3: memref<1x1x2x128xbf16, #tpu.memory_space<vmem>>, %arg4: memref<128x128xbf16, #tpu.memory_space<vmem>>, %arg5: memref<384x128xbf16, #tpu.memory_space<vmem>>, %arg6: memref<128x128xbf16, #tpu.memory_space<vmem>>, %arg7: memref<1x128xf32, #tpu.memory_space<vmem>>, %arg8: memref<1x128xf32, #tpu.memory_space<vmem>>, %arg9: memref<1x128xf32, #tpu.memory_space<vmem>>, %arg10: memref<1x8x128xf32, #tpu.memory_space<vmem>>) attributes {dimension_semantics = [#tpu.dimension_semantics<parallel>, #tpu.dimension_semantics<parallel>], iteration_bounds = array<i64: 2, 2>, scalar_prefetch = 0 : i64, scratch_operands = 0 : i64, tpu.core_type = #tpu.core_type<tc>, window_params = [{transform_indices = @transform_0, window_bounds = array<i64: 1, 8, 128>}, {transform_indices = @transform_1, window_bounds = array<i64: 1, 1, 2, 128>}, {pipeline_mode = #tpu.pipeline_mode<synchronous>, transform_indices = @transform_2, window_bounds = array<i64: 128, 128>}, {pipeline_mode = #tpu.pipeline_mode<synchronous>, transform_indices = @transform_3, window_bounds = array<i64: 384, 128>}, {pipeline_mode = #tpu.pipeline_mode<synchronous>, transform_indices = @transform_4, window_bounds = array<i64: 128, 128>}, {pipeline_mode = #tpu.pipeline_mode<synchronous>, transform_indices = @transform_5, window_bounds = array<i64: 1, 128>}, {pipeline_mode = #tpu.pipeline_mode<synchronous>, transform_indices = @transform_6, window_bounds = array<i64: 1, 128>}, {pipeline_mode = #tpu.pipeline_mode<synchronous>, transform_indices = @transform_7, window_bounds = array<i64: 1, 128>}, {transform_indices = @transform_8, window_bounds = array<i64: 1, 8, 128>}]} {
    %c0 = arith.constant 0 : index
    %c0_0 = arith.constant 0 : index
    %c0_1 = arith.constant 0 : index
    %0 = vector.load %arg2[%c0, %c0_0, %c0_1] : memref<1x8x128xbf16, #tpu.memory_space<vmem>>, vector<1x8x128xbf16>
    %1 = vector.shape_cast %0 : vector<1x8x128xbf16> to vector<8x128xbf16>
    %c0_2 = arith.constant 0 : index
    %c0_3 = arith.constant 0 : index
    %c0_4 = arith.constant 0 : index
    %c0_5 = arith.constant 0 : index
    %2 = vector.load %arg3[%c0_2, %c0_3, %c0_4, %c0_5] : memref<1x1x2x128xbf16, #tpu.memory_space<vmem>>, vector<1x1x1x128xbf16>
    %3 = vector.shape_cast %2 : vector<1x1x1x128xbf16> to vector<1x128xbf16>
    %c0_6 = arith.constant 0 : index
    %c0_7 = arith.constant 0 : index
    %c1 = arith.constant 1 : index
    %c0_8 = arith.constant 0 : index
    %4 = vector.load %arg3[%c0_6, %c0_7, %c1, %c0_8] : memref<1x1x2x128xbf16, #tpu.memory_space<vmem>>, vector<1x1x1x128xbf16>
    %5 = vector.shape_cast %4 : vector<1x1x1x128xbf16> to vector<1x128xbf16>
    %6 = tpu.concatenate %3, %1, %5 in 0 : vector<1x128xbf16>, vector<8x128xbf16>, vector<1x128xbf16> -> vector<10x128xbf16>
    %c0_9 = arith.constant 0 : index
    %c0_10 = arith.constant 0 : index
    %7 = vector.load %arg4[%c0_9, %c0_10] : memref<128x128xbf16, #tpu.memory_space<vmem>>, vector<128x128xbf16>
    %cst = arith.constant dense<0.000000e+00> : vector<10x128xf32>
    %8 = tpu.matmul %6, %7, %cst {dimension_numbers = #tpu.dot_dimension_numbers<[1], [0], [0], [1], [0, 0, 1, 1], [], []>} : vector<10x128xbf16>, vector<128x128xbf16>, vector<10x128xf32> -> vector<10x128xf32>
    %c0_11 = arith.constant 0 : index
    %c0_12 = arith.constant 0 : index
    %9 = vector.load %arg7[%c0_11, %c0_12] : memref<1x128xf32, #tpu.memory_space<vmem>>, vector<1x128xf32>
    %10 = vector.broadcast %9 : vector<1x128xf32> to vector<10x128xf32>
    %11 = arith.addf %8, %10 : vector<10x128xf32>
    %cst_13 = arith.constant 0.000000e+00 : f32
    %12 = vector.broadcast %cst_13 : f32 to vector<10x128xf32>
    %13 = arith.maximumf %11, %12 : vector<10x128xf32>
    %c0_i32 = arith.constant 0 : i32
    %14 = arith.cmpi sgt, %arg1, %c0_i32 : i32
    %15 = arith.extui %14 : i1 to i32
    %16 = arith.sitofp %15 : i32 to f32
    %c1_i32 = arith.constant 1 : i32
    %17 = arith.cmpi slt, %arg1, %c1_i32 : i32
    %18 = arith.extui %17 : i1 to i32
    %19 = arith.sitofp %18 : i32 to f32
    %20 = vector.extract_strided_slice %13 {offsets = [0, 0], sizes = [1, 128], strides = [1, 1]} : vector<10x128xf32> to vector<1x128xf32>
    %21 = vector.broadcast %16 : f32 to vector<1x128xf32>
    %22 = arith.mulf %20, %21 : vector<1x128xf32>
    %23 = vector.extract_strided_slice %13 {offsets = [1, 0], sizes = [8, 128], strides = [1, 1]} : vector<10x128xf32> to vector<8x128xf32>
    %24 = vector.extract_strided_slice %13 {offsets = [9, 0], sizes = [1, 128], strides = [1, 1]} : vector<10x128xf32> to vector<1x128xf32>
    %25 = vector.broadcast %19 : f32 to vector<1x128xf32>
    %26 = arith.mulf %24, %25 : vector<1x128xf32>
    %27 = tpu.concatenate %22, %23, %26 in 0 : vector<1x128xf32>, vector<8x128xf32>, vector<1x128xf32> -> vector<10x128xf32>
    %28 = arith.truncf %27 : vector<10x128xf32> to vector<10x128xbf16>
    %29 = vector.extract_strided_slice %28 {offsets = [0, 0], sizes = [8, 128], strides = [1, 1]} : vector<10x128xbf16> to vector<8x128xbf16>
    %30 = vector.extract_strided_slice %28 {offsets = [1, 0], sizes = [8, 128], strides = [1, 1]} : vector<10x128xbf16> to vector<8x128xbf16>
    %31 = vector.extract_strided_slice %28 {offsets = [2, 0], sizes = [8, 128], strides = [1, 1]} : vector<10x128xbf16> to vector<8x128xbf16>
    %32 = tpu.concatenate %29, %30, %31 in 1 : vector<8x128xbf16>, vector<8x128xbf16>, vector<8x128xbf16> -> vector<8x384xbf16>
    %c0_14 = arith.constant 0 : index
    %c0_15 = arith.constant 0 : index
    %33 = vector.load %arg5[%c0_14, %c0_15] : memref<384x128xbf16, #tpu.memory_space<vmem>>, vector<384x128xbf16>
    %cst_16 = arith.constant dense<0.000000e+00> : vector<8x128xf32>
    %34 = tpu.matmul %32, %33, %cst_16 {dimension_numbers = #tpu.dot_dimension_numbers<[1], [0], [0], [1], [0, 0, 1, 1], [], []>} : vector<8x384xbf16>, vector<384x128xbf16>, vector<8x128xf32> -> vector<8x128xf32>
    %c0_17 = arith.constant 0 : index
    %c0_18 = arith.constant 0 : index
    %35 = vector.load %arg8[%c0_17, %c0_18] : memref<1x128xf32, #tpu.memory_space<vmem>>, vector<1x128xf32>
    %36 = vector.broadcast %35 : vector<1x128xf32> to vector<8x128xf32>
    %37 = arith.addf %34, %36 : vector<8x128xf32>
    %cst_19 = arith.constant 0.000000e+00 : f32
    %38 = vector.broadcast %cst_19 : f32 to vector<8x128xf32>
    %39 = arith.maximumf %37, %38 : vector<8x128xf32>
    %40 = arith.truncf %39 : vector<8x128xf32> to vector<8x128xbf16>
    %c0_20 = arith.constant 0 : index
    %c0_21 = arith.constant 0 : index
    %41 = vector.load %arg6[%c0_20, %c0_21] : memref<128x128xbf16, #tpu.memory_space<vmem>>, vector<128x128xbf16>
    %cst_22 = arith.constant dense<0.000000e+00> : vector<8x128xf32>
    %42 = tpu.matmul %40, %41, %cst_22 {dimension_numbers = #tpu.dot_dimension_numbers<[1], [0], [0], [1], [0, 0, 1, 1], [], []>} : vector<8x128xbf16>, vector<128x128xbf16>, vector<8x128xf32> -> vector<8x128xf32>
    %43 = arith.extf %1 : vector<8x128xbf16> to vector<8x128xf32>
    %c0_23 = arith.constant 0 : index
    %c0_24 = arith.constant 0 : index
    %44 = vector.load %arg9[%c0_23, %c0_24] : memref<1x128xf32, #tpu.memory_space<vmem>>, vector<1x128xf32>
    %45 = vector.broadcast %44 : vector<1x128xf32> to vector<8x128xf32>
    %46 = arith.addf %42, %45 : vector<8x128xf32>
    %47 = arith.addf %46, %43 : vector<8x128xf32>
    %cst_25 = arith.constant 0.000000e+00 : f32
    %48 = vector.broadcast %cst_25 : f32 to vector<8x128xf32>
    %49 = arith.maximumf %47, %48 : vector<8x128xf32>
    %c0_26 = arith.constant 0 : index
    %c0_27 = arith.constant 0 : index
    %c0_28 = arith.constant 0 : index
    %50 = vector.load %arg10[%c0_26, %c0_27, %c0_28] : memref<1x8x128xf32, #tpu.memory_space<vmem>>, vector<1x8x128xf32>
    %51 = vector.shape_cast %50 : vector<1x8x128xf32> to vector<8x128xf32>
    %52 = vector.shape_cast %49 : vector<8x128xf32> to vector<1x8x128xf32>
    tpu.vector_store %arg10[%c0_26, %c0_27, %c0_28], %52 {strides = array<i32>} : memref<1x8x128xf32, #tpu.memory_space<vmem>>, vector<1x8x128xf32>,
    return
  }
  func.func @transform_0(%arg0: i32, %arg1: i32) -> (i32, i32, i32) {
    %c0_i32 = arith.constant 0 : i32
    %c0_i32_0 = arith.constant 0 : i32
    return %arg0, %arg1, %c0_i32 : i32, i32, i32
  }
  func.func @transform_1(%arg0: i32, %arg1: i32) -> (i32, i32, i32, i32) {
    %c0_i32 = arith.constant 0 : i32
    %c0_i32_0 = arith.constant 0 : i32
    %c0_i32_1 = arith.constant 0 : i32
    return %arg0, %arg1, %c0_i32, %c0_i32_0 : i32, i32, i32, i32
  }
  func.func @transform_2(%arg0: i32, %arg1: i32) -> (i32, i32) {
    %c0_i32 = arith.constant 0 : i32
    %c0_i32_0 = arith.constant 0 : i32
    %c0_i32_1 = arith.constant 0 : i32
    return %c0_i32, %c0_i32_0 : i32, i32
  }
  func.func @transform_3(%arg0: i32, %arg1: i32) -> (i32, i32) {
    %c0_i32 = arith.constant 0 : i32
    %c0_i32_0 = arith.constant 0 : i32
    %c0_i32_1 = arith.constant 0 : i32
    return %c0_i32, %c0_i32_0 : i32, i32
  }
  func.func @transform_4(%arg0: i32, %arg1: i32) -> (i32, i32) {
    %c0_i32 = arith.constant 0 : i32
    %c0_i32_0 = arith.constant 0 : i32
    %c0_i32_1 = arith.constant 0 : i32
    return %c0_i32, %c0_i32_0 : i32, i32
  }
  func.func @transform_5(%arg0: i32, %arg1: i32) -> (i32, i32) {
    %c0_i32 = arith.constant 0 : i32
    %c0_i32_0 = arith.constant 0 : i32
    %c0_i32_1 = arith.constant 0 : i32
    return %c0_i32, %c0_i32_0 : i32, i32
  }
  func.func @transform_6(%arg0: i32, %arg1: i32) -> (i32, i32) {
    %c0_i32 = arith.constant 0 : i32
    %c0_i32_0 = arith.constant 0 : i32
    %c0_i32_1 = arith.constant 0 : i32
    return %c0_i32, %c0_i32_0 : i32, i32
  }
  func.func @transform_7(%arg0: i32, %arg1: i32) -> (i32, i32) {
    %c0_i32 = arith.constant 0 : i32
    %c0_i32_0 = arith.constant 0 : i32
    %c0_i32_1 = arith.constant 0 : i32
    return %c0_i32, %c0_i32_0 : i32, i32
  }
  func.func @transform_8(%arg0: i32, %arg1: i32) -> (i32, i32, i32) {
    %c0_i32 = arith.constant 0 : i32
    %c0_i32_0 = arith.constant 0 : i32
    return %arg0, %arg1, %c0_i32 : i32, i32, i32
  }
}

</mosaic_0001>

<llo_original>
// kernel: _bottleneck_impl.1
$region0: #{_bottleneck_impl.1}
  #allocation0 [shape = 'u32[]', space=smem, size = 0x4, offset = 0x4, fixed_abs, tag = 'smem constant byte address 0x4 - core index']
  #allocation1 [shape = 'u32[144,128]{1,0:T(1,128)}', space=vmem, size = 0x12000, scoped, tag = 'internal scratch']
  %s0 = inlined_call_operand.vmem [shape: bf16[2,16,128], index: 0, kind: input, shape index: {}]
  %s1 = inlined_call_operand.vmem [shape: bf16[2,2,2,128], index: 1, kind: input, shape index: {}]
  %s2 = inlined_call_operand.vmem [shape: bf16[128,128], index: 2, kind: input, shape index: {}]
  %s3 = inlined_call_operand.vmem [shape: bf16[384,128], index: 3, kind: input, shape index: {}]
  %s4 = inlined_call_operand.vmem [shape: bf16[128,128], index: 4, kind: input, shape index: {}]
  %s5 = inlined_call_operand.vmem [shape: f32[1,128], index: 5, kind: input, shape index: {}]
  %s6 = inlined_call_operand.vmem [shape: f32[1,128], index: 6, kind: input, shape index: {}]
  %s7 = inlined_call_operand.vmem [shape: f32[1,128], index: 7, kind: input, shape index: {}]
  %s8 = inlined_call_operand.vmem [shape: f32[2,16,128], index: 8, kind: output, shape index: {}]
  %s9 = sld [smem:[#allocation0]]
  $region65: #{_bottleneck_impl.1} parent=0
    _
  %s11 = ssub.s32 1, %s9
  %s12 = scalar_select 0, %s11, %s9
  loop: start=0, step=1, limit=6
  $region2: #{_bottleneck_impl.1} parent=0 // loop_pre_header
    _
  $region3: #{_bottleneck_impl.1} parent=0 // loop_header
    %s14 = sphi 0, %s18
    %p15 = scmp.ge.s32.totalorder %s14, 6
    %s21 = sphi 0, %s33
    %s22 = sphi 0, %s29
    %s23 = sphi 0, %s21
    %s24 = sphi 0, %s22
    %s25 = sphi 0, %s23
    %s26 = sphi 0, %s24
    %s38 = sphi 0, %s40
    %s41 = sphi 0, %s38
    %s42 = sphi 0, %s41
    %s58 = sphi 0, %s42
    %s66 = sphi 0, %s68
    %s69 = sphi 0, %s66
    %s70 = sphi 0, %s69
    %s86 = sphi 0, %s70
    %s90 = sphi 0, %s90
    %s92 = sphi 0, %s90
    %s93 = sphi 0, %s92
    %s107 = sphi 0, %s93
    %s111 = sphi 0, %s111
    %s113 = sphi 0, %s111
    %s114 = sphi 0, %s113
    %s128 = sphi 0, %s114
    %s132 = sphi 0, %s132
    %s134 = sphi 0, %s132
    %s135 = sphi 0, %s134
    %s149 = sphi 0, %s135
    %s153 = sphi 0, %s153
    %s155 = sphi 0, %s153
    %s156 = sphi 0, %s155
    %s170 = sphi 0, %s156
    %s174 = sphi 0, %s174
    %s176 = sphi 0, %s174
    %s177 = sphi 0, %s176
    %s191 = sphi 0, %s177
    %s195 = sphi 0, %s195
    %s197 = sphi 0, %s195
    %s198 = sphi 0, %s197
    %s212 = sphi 0, %s198
    %s220 = sphi 0, %s222
    %s223 = sphi 0, %s220
    %s224 = sphi 0, %s223
    %s240 = sphi 0, %s224
  $region4: #{_bottleneck_impl.1} parent=0 // loop_header_branch
    %17 = sbr.rel (%p15) target = $region8
  $region5: #{_bottleneck_impl.1} parent=0 // loop_body
    %s19 = ssub.s32 %s14, 1
    %s20 = ssub.s32 %s14, 2
    %s27 = sadd.s32 1, %s22
    %p28 = scmp.ge.s32.totalorder %s27, 2
    %s29 = scalar_select %p28, 0, %s27
    %s30 = sadd.s32 1, %s21
    %s31 = scalar_select %p28, %s30, %s21
    %p32 = scmp.ge.s32.totalorder %s31, 2
    %s33 = scalar_select %p32, 0, %s31
    %s34 = ssub.s32 %s21, %s33
    %s35 = ssub.s32 %s22, %s29
    %s36 = sor.u32 %s34, %s35
    %p37 = scmp.eq.s32.totalorder %s36, 0
    %s39 = sadd.s32 %s38, 1
    %s40 = scalar_select %p37, %s38, %s39
    %p43 = pneg %p37
    %p44 = scmp.eq.s32.totalorder %s14, 3
    %p45 = por %p43, %p44
    %p46 = scmp.ne.s32.totalorder %s38, %s41
    %p47 = scmp.eq.s32.totalorder %s14, 0
    %p48 = por %p46, %p47
    %p49 = scmp.ne.s32.totalorder %s38, %s41
    %p50 = scmp.eq.s32.totalorder %s19, 3
    %p51 = por %p49, %p50
    %p52 = scmp.ne.s32.totalorder %s41, %s42
    %p53 = scmp.eq.s32.totalorder %s19, 0
    %p54 = por %p52, %p53
    %p55 = scmp.ne.s32.totalorder %s41, %s42
    %p56 = scmp.eq.s32.totalorder %s20, 3
    %p57 = por %p55, %p56
    %p59 = scmp.ne.s32.totalorder %s42, %s58
    %p60 = scmp.eq.s32.totalorder %s20, 0
    %p61 = por %p59, %p60
    %s62 = ssub.s32 %s21, %s33
    %s63 = ssub.s32 %s22, %s29
    %s64 = sor.u32 %s62, %s63
    %p65 = scmp.eq.s32.totalorder %s64, 0
    %s67 = sadd.s32 %s66, 1
    %s68 = scalar_select %p65, %s66, %s67
    %p71 = pneg %p65
    %p72 = scmp.eq.s32.totalorder %s14, 3
    %p73 = por %p71, %p72
    %p74 = scmp.ne.s32.totalorder %s66, %s69
    %p75 = scmp.eq.s32.totalorder %s14, 0
    %p76 = por %p74, %p75
    %p77 = scmp.ne.s32.totalorder %s66, %s69
    %p78 = scmp.eq.s32.totalorder %s19, 3
    %p79 = por %p77, %p78
    %p80 = scmp.ne.s32.totalorder %s69, %s70
    %p81 = scmp.eq.s32.totalorder %s19, 0
    %p82 = por %p80, %p81
    %p83 = scmp.ne.s32.totalorder %s69, %s70
    %p84 = scmp.eq.s32.totalorder %s20, 3
    %p85 = por %p83, %p84
    %p87 = scmp.ne.s32.totalorder %s70, %s86
    %p88 = scmp.eq.s32.totalorder %s20, 0
    %p89 = por %p87, %p88
    %s91 = sadd.s32 %s90, 1
    %p94 = scmp.eq.s32.totalorder %s14, 3
    %p95 = scmp.ne.s32.totalorder %s90, %s92
    %p96 = scmp.eq.s32.totalorder %s14, 0
    %p97 = por %p95, %p96
    %p98 = scmp.ne.s32.totalorder %s90, %s92
    %p99 = scmp.eq.s32.totalorder %s19, 3
    %p100 = por %p98, %p99
    %p101 = scmp.ne.s32.totalorder %s92, %s93
    %p102 = scmp.eq.s32.totalorder %s19, 0
    %p103 = por %p101, %p102
    %p104 = scmp.ne.s32.totalorder %s92, %s93
    %p105 = scmp.eq.s32.totalorder %s20, 3
    %p106 = por %p104, %p105
    %p108 = scmp.ne.s32.totalorder %s93, %s107
    %p109 = scmp.eq.s32.totalorder %s20, 0
    %p110 = por %p108, %p109
    %s112 = sadd.s32 %s111, 1
    %p115 = scmp.eq.s32.totalorder %s14, 3
    %p116 = scmp.ne.s32.totalorder %s111, %s113
    %p117 = scmp.eq.s32.totalorder %s14, 0
    %p118 = por %p116, %p117
    %p119 = scmp.ne.s32.totalorder %s111, %s113
    %p120 = scmp.eq.s32.totalorder %s19, 3
    %p121 = por %p119, %p120
    %p122 = scmp.ne.s32.totalorder %s113, %s114
    %p123 = scmp.eq.s32.totalorder %s19, 0
    %p124 = por %p122, %p123
    %p125 = scmp.ne.s32.totalorder %s113, %s114
    %p126 = scmp.eq.s32.totalorder %s20, 3
    %p127 = por %p125, %p126
    %p129 = scmp.ne.s32.totalorder %s114, %s128
    %p130 = scmp.eq.s32.totalorder %s20, 0
    %p131 = por %p129, %p130
    %s133 = sadd.s32 %s132, 1
    %p136 = scmp.eq.s32.totalorder %s14, 3
    %p137 = scmp.ne.s32.totalorder %s132, %s134
    %p138 = scmp.eq.s32.totalorder %s14, 0
    %p139 = por %p137, %p138
    %p140 = scmp.ne.s32.totalorder %s132, %s134
    %p141 = scmp.eq.s32.totalorder %s19, 3
    %p142 = por %p140, %p141
    %p143 = scmp.ne.s32.totalorder %s134, %s135
    %p144 = scmp.eq.s32.totalorder %s19, 0
    %p145 = por %p143, %p144
    %p146 = scmp.ne.s32.totalorder %s134, %s135
    %p147 = scmp.eq.s32.totalorder %s20, 3
    %p148 = por %p146, %p147
    %p150 = scmp.ne.s32.totalorder %s135, %s149
    %p151 = scmp.eq.s32.totalorder %s20, 0
    %p152 = por %p150, %p151
    %s154 = sadd.s32 %s153, 1
    %p157 = scmp.eq.s32.totalorder %s14, 3
    %p158 = scmp.ne.s32.totalorder %s153, %s155
    %p159 = scmp.eq.s32.totalorder %s14, 0
    %p160 = por %p158, %p159
    %p161 = scmp.ne.s32.totalorder %s153, %s155
    %p162 = scmp.eq.s32.totalorder %s19, 3
    %p163 = por %p161, %p162
    %p164 = scmp.ne.s32.totalorder %s155, %s156
    %p165 = scmp.eq.s32.totalorder %s19, 0
    %p166 = por %p164, %p165
    %p167 = scmp.ne.s32.totalorder %s155, %s156
    %p168 = scmp.eq.s32.totalorder %s20, 3
    %p169 = por %p167, %p168
    %p171 = scmp.ne.s32.totalorder %s156, %s170
    %p172 = scmp.eq.s32.totalorder %s20, 0
    %p173 = por %p171, %p172
    %s175 = sadd.s32 %s174, 1
    %p178 = scmp.eq.s32.totalorder %s14, 3
    %p179 = scmp.ne.s32.totalorder %s174, %s176
    %p180 = scmp.eq.s32.totalorder %s14, 0
    %p181 = por %p179, %p180
    %p182 = scmp.ne.s32.totalorder %s174, %s176
    %p183 = scmp.eq.s32.totalorder %s19, 3
    %p184 = por %p182, %p183
    %p185 = scmp.ne.s32.totalorder %s176, %s177
    %p186 = scmp.eq.s32.totalorder %s19, 0
    %p187 = por %p185, %p186
    %p188 = scmp.ne.s32.totalorder %s176, %s177
    %p189 = scmp.eq.s32.totalorder %s20, 3
    %p190 = por %p188, %p189
    %p192 = scmp.ne.s32.totalorder %s177, %s191
    %p193 = scmp.eq.s32.totalorder %s20, 0
    %p194 = por %p192, %p193
    %s196 = sadd.s32 %s195, 1
    %p199 = scmp.eq.s32.totalorder %s14, 3
    %p200 = scmp.ne.s32.totalorder %s195, %s197
    %p201 = scmp.eq.s32.totalorder %s14, 0
    %p202 = por %p200, %p201
    %p203 = scmp.ne.s32.totalorder %s195, %s197
    %p204 = scmp.eq.s32.totalorder %s19, 3
    %p205 = por %p203, %p204
    %p206 = scmp.ne.s32.totalorder %s197, %s198
    %p207 = scmp.eq.s32.totalorder %s19, 0
    %p208 = por %p206, %p207
    %p209 = scmp.ne.s32.totalorder %s197, %s198
    %p210 = scmp.eq.s32.totalorder %s20, 3
    %p211 = por %p209, %p210
    %p213 = scmp.ne.s32.totalorder %s198, %s212
    %p214 = scmp.eq.s32.totalorder %s20, 0
    %p215 = por %p213, %p214
    %s216 = ssub.s32 %s21, %s33
    %s217 = ssub.s32 %s22, %s29
    %s218 = sor.u32 %s216, %s217
    %p219 = scmp.eq.s32.totalorder %s218, 0
    %s221 = sadd.s32 %s220, 1
    %s222 = scalar_select %p219, %s220, %s221
    %p225 = pneg %p219
    %p226 = scmp.eq.s32.totalorder %s14, 3
    %p227 = por %p225, %p226
    %p228 = scmp.ne.s32.totalorder %s220, %s223
    %p229 = scmp.eq.s32.totalorder %s14, 0
    %p230 = por %p228, %p229
    %p231 = scmp.ne.s32.totalorder %s220, %s223
    %p232 = scmp.eq.s32.totalorder %s19, 3
    %p233 = por %p231, %p232
    %p234 = scmp.ne.s32.totalorder %s223, %s224
    %p235 = scmp.eq.s32.totalorder %s19, 0
    %p236 = por %p234, %p235
    %p237 = scmp.ne.s32.totalorder %s223, %s224
    %p238 = scmp.eq.s32.totalorder %s20, 3
    %p239 = por %p237, %p238
    %p241 = scmp.ne.s32.totalorder %s224, %s240
    %p242 = scmp.eq.s32.totalorder %s20, 0
    %p243 = por %p241, %p242
    %p244 = scmp.le.s32.totalorder 1, %s14
    %p245 = scmp.lt.s32.totalorder %s14, 5
    %p246 = pnand %p244, %p245
    %p247 = pneg %p246
    // Predicated region
    $region9: #{_bottleneck_impl.1} parent=5 // pred_check
      _
    $region10: #{_bottleneck_impl.1} parent=5 // pred_check_branch
      %249 = sbr.rel (%p246) target = $region12
    $region11: #{_bottleneck_impl.1} parent=5 // pred_region
      %s250 = ssub.s32 %s14, 1
      // Predicated region
      $region13: #{_bottleneck_impl.1} parent=11 // pred_check
        %p251 = pneg %p103
      $region14: #{_bottleneck_impl.1} parent=11 // pred_check_branch
        %253 = sbr.rel (%p251) target = $region16
      $region15: #{_bottleneck_impl.1} parent=11 // pred_region
        _
      $region16: #{_bottleneck_impl.1} parent=11 // pred_fallthru
        _
      // Predicated region
      $region17: #{_bottleneck_impl.1} parent=11 // pred_check
        %p254 = pneg %p124
      $region18: #{_bottleneck_impl.1} parent=11 // pred_check_branch
        %256 = sbr.rel (%p254) target = $region20
      $region19: #{_bottleneck_impl.1} parent=11 // pred_region
        _
      $region20: #{_bottleneck_impl.1} parent=11 // pred_fallthru
        _
      // Predicated region
      $region21: #{_bottleneck_impl.1} parent=11 // pred_check
        %p257 = pneg %p145
      $region22: #{_bottleneck_impl.1} parent=11 // pred_check_branch
        %259 = sbr.rel (%p257) target = $region24
      $region23: #{_bottleneck_impl.1} parent=11 // pred_region
        _
      $region24: #{_bottleneck_impl.1} parent=11 // pred_fallthru
        _
      // Predicated region
      $region25: #{_bottleneck_impl.1} parent=11 // pred_check
        %p260 = pneg %p166
      $region26: #{_bottleneck_impl.1} parent=11 // pred_check_branch
        %262 = sbr.rel (%p260) target = $region28
      $region27: #{_bottleneck_impl.1} parent=11 // pred_region
        _
      $region28: #{_bottleneck_impl.1} parent=11 // pred_fallthru
        _
      // Predicated region
      $region29: #{_bottleneck_impl.1} parent=11 // pred_check
        %p263 = pneg %p187
      $region30: #{_bottleneck_impl.1} parent=11 // pred_check_branch
        %265 = sbr.rel (%p263) target = $region32
      $region31: #{_bottleneck_impl.1} parent=11 // pred_region
        _
      $region32: #{_bottleneck_impl.1} parent=11 // pred_fallthru
        _
      // Predicated region
      $region33: #{_bottleneck_impl.1} parent=11 // pred_check
        %p266 = pneg %p208
      $region34: #{_bottleneck_impl.1} parent=11 // pred_check_branch
        %268 = sbr.rel (%p266) target = $region36
      $region35: #{_bottleneck_impl.1} parent=11 // pred_region
        _
      $region36: #{_bottleneck_impl.1} parent=11 // pred_fallthru
        _
    $region12: #{_bottleneck_impl.1} parent=5 // pred_fallthru
      _
    %p269 = scmp.lt.s32.totalorder %s14, 4
    // Predicated region
    $region37: #{_bottleneck_impl.1} parent=5 // pred_check
      %p270 = pneg %p269
    $region38: #{_bottleneck_impl.1} parent=5 // pred_check_branch
      %272 = sbr.rel (%p270) target = $region40
    $region39: #{_bottleneck_impl.1} parent=5 // pred_region
      // Predicated region
      $region41: #{_bottleneck_impl.1} parent=39 // pred_check
        %p273 = pneg %p48
      $region42: #{_bottleneck_impl.1} parent=39 // pred_check_branch
        %275 = sbr.rel (%p273) target = $region44
      $region43: #{_bottleneck_impl.1} parent=39 // pred_region
        %p276 = scmp.lt.s32.totalorder %s21, 1
        %s277 = scalar_select %p276, %s21, 1
        %p278 = scmp.lt.s32.totalorder %s22, 1
        %s279 = scalar_select %p278, %s22, 1
        %s280 = smul.addr %s277, 2
        %s281 = sadd.s32 %s279, %s280
        %s282 = smul.addr %s281, 4
        %s283 = scalar_lea.vmem %s0, %s282
      $region44: #{_bottleneck_impl.1} parent=39 // pred_fallthru
        _
      // Predicated region
      $region45: #{_bottleneck_impl.1} parent=39 // pred_check
        %p284 = pneg %p76
      $region46: #{_bottleneck_impl.1} parent=39 // pred_check_branch
        %286 = sbr.rel (%p284) target = $region48
      $region47: #{_bottleneck_impl.1} parent=39 // pred_region
        %p287 = scmp.lt.s32.totalorder %s21, 1
        %s288 = scalar_select %p287, %s21, 1
        %p289 = scmp.lt.s32.totalorder %s22, 1
        %s290 = scalar_select %p289, %s22, 1
        %s291 = smul.addr %s288, 2
        %s292 = sadd.s32 %s290, %s291
        %s293 = scalar_lea.vmem %s1, %s292
      $region48: #{_bottleneck_impl.1} parent=39 // pred_fallthru
        _
    $region40: #{_bottleneck_impl.1} parent=5 // pred_fallthru
      _
    %p294 = scmp.le.s32.totalorder 1, %s14
    %p295 = scmp.lt.s32.totalorder %s14, 5
    %p296 = pnand %p294, %p295
    %p297 = pneg %p296
    // Predicated region
    $region49: #{_bottleneck_impl.1} parent=5 // pred_check
      _
    $region50: #{_bottleneck_impl.1} parent=5 // pred_check_branch
      %299 = sbr.rel (%p296) target = $region52
    $region51: #{_bottleneck_impl.1} parent=5 // pred_region
      %s300 = ssub.s32 %s14, 1
      %p301 = scmp.lt.s32.totalorder %s23, 1
      %s302 = scalar_select %p301, %s23, 1
      %p303 = scmp.lt.s32.totalorder %s24, 1
      %s304 = scalar_select %p303, %s24, 1
      %s305 = smul.addr %s302, 2
      %s306 = sadd.s32 %s304, %s305
      %s307 = smul.addr %s306, 4
      %s308 = scalar_lea.vmem %s0, %s307
      %p309 = pneg %p54
      %p310 = pneg %p51
      %p311 = scmp.lt.s32.totalorder %s23, 1
      %s312 = scalar_select %p311, %s23, 1
      %p313 = scmp.lt.s32.totalorder %s24, 1
      %s314 = scalar_select %p313, %s24, 1
      %s315 = smul.addr %s312, 2
      %s316 = sadd.s32 %s314, %s315
      %s317 = scalar_lea.vmem %s1, %s316
      %p318 = pneg %p82
      %p319 = pneg %p79
      %p320 = pneg %p103
      %p321 = pneg %p100
      %p322 = pneg %p124
      %p323 = pneg %p121
      %p324 = pneg %p145
      %p325 = pneg %p142
      %p326 = pneg %p166
      %p327 = pneg %p163
      %p328 = pneg %p187
      %p329 = pneg %p184
      %p330 = pneg %p208
      %p331 = pneg %p205
      %p332 = pneg %p236
      %p333 = pneg %p233
      %p334 = scmp.lt.s32.totalorder %s23, 1
      %s335 = scalar_select %p334, %s23, 1
      %p336 = scmp.lt.s32.totalorder %s24, 1
      %s337 = scalar_select %p336, %s24, 1
      %s338 = smul.addr %s335, 2
      %s339 = sadd.s32 %s337, %s338
      %s340 = smul.addr %s339, 8
      %s341 = scalar_lea.vmem %s8, %s340
      %p342 = scmp.lt.s32.totalorder %s23, 1
      %s343 = scalar_select %p342, %s23, 1
      %p344 = scmp.lt.s32.totalorder %s24, 1
      %s345 = scalar_select %p344, %s24, 1
      %s346 = smul.addr %s343, 2
      %s347 = sadd.s32 %s345, %s346
      %s348 = smul.addr %s347, 4
      %s349 = scalar_lea.vmem %s0, %s348
      %p350 = scmp.lt.s32.totalorder %s23, 1
      %s351 = scalar_select %p350, %s23, 1
      %p352 = scmp.lt.s32.totalorder %s24, 1
      %s353 = scalar_select %p352, %s24, 1
      %s354 = smul.addr %s351, 2
      %s355 = sadd.s32 %s353, %s354
      %s356 = scalar_lea.vmem %s1, %s355
      %p357 = scmp.lt.s32.totalorder %s23, 1
      %s358 = scalar_select %p357, %s23, 1
      %p359 = scmp.lt.s32.totalorder %s24, 1
      %s360 = scalar_select %p359, %s24, 1
      %s361 = smul.addr %s358, 2
      %s362 = sadd.s32 %s360, %s361
      %s363 = smul.addr %s362, 8
      %s364 = scalar_lea.vmem %s8, %s363
      %v366 = vld [vmem:[%s349] sm:$0xf]
      %v367 = vld [vmem:[%s356] sm:$0x1]
      %v369 = vunpack.c.l.b16 %v366
      %v370 = vpack.c.b16 %v369, %v369
      %v372 = vshrl.u32 %v370, 16
      %v374 = vrot.slane %v372, 7
      %v375 = vshll.u32 %v370, 16
      %v377 = vor.u32 %v374, %v375
      %v381 = vunpack.c.l.s4 1966171168
      %v382 = vunpack.c.0.s8 %v381
      %v383 = vlaneseq
      %v384 = vshrl.u32 %v383, 7
      %v385 = vsub.s32 %v382, %v384
      %v386 = vrot.slane %v367, %v385
      %v388 = vunpack.c.l.s4 1966171168
      %v389 = vunpack.c.0.s8 %v388
      %v390 = vlaneseq
      %v391 = vshrl.u32 %v390, 7
      %v392 = vsub.s32 %v389, %v391
      %v393 = vrot.slane %v386, %v392
      %v394 = vcombine.low %v393, %v393
      %vm396 = vcmask 1040384
      %vm397 = vsmask.f32 256
      %vm398 = vmand %vm396, %vm397
      %v399 = vsel %vm398, %v367, %v377
      %vm400 = vcmask 1044480
      %vm401 = vsmask.f32 4352
      %vm402 = vmand %vm400, %vm401
      %v403 = vsel %vm402, %v399, %v394
      %v404 = vld [vmem:[%s2] sm:$0xf]
      %v405 = vld [vmem:[%s2 + $0x4] sm:$0xf]
      %v406 = vld [vmem:[%s2 + $0x8] sm:$0xf]
      %v407 = vld [vmem:[%s2 + $0xc] sm:$0xf]
      %v408 = vld [vmem:[%s2 + $0x10] sm:$0xf]
      %v409 = vld [vmem:[%s2 + $0x14] sm:$0xf]
      %v410 = vld [vmem:[%s2 + $0x18] sm:$0xf]
      %v411 = vld [vmem:[%s2 + $0x1c] sm:$0xf]
      %v412 = vld [vmem:[%s2 + $0x20] sm:$0xf]
      %v413 = vld [vmem:[%s2 + $0x24] sm:$0xf]
      %v414 = vld [vmem:[%s2 + $0x28] sm:$0xf]
      %v415 = vld [vmem:[%s2 + $0x2c] sm:$0xf]
      %v416 = vld [vmem:[%s2 + $0x30] sm:$0xf]
      %v417 = vld [vmem:[%s2 + $0x34] sm:$0xf]
      %v418 = vld [vmem:[%s2 + $0x38] sm:$0xf]
      %v419 = vld [vmem:[%s2 + $0x3c] sm:$0xf]
      %v420 = vld [vmem:[%s5] sm:$0x1]
      %v422 = vlaneseq
      %v423 = vshrl.u32 %v422, 7
      %v424 = vsub.s32 0, %v423
      %v425 = vrot.slane %v420, %v424
      %v443 = vunpack.c.l.b16 %v404
      %v444 = vunpack.c.l.b16 %v405
      %v445 = vunpack.c.l.b16 %v406
      %v446 = vunpack.c.l.b16 %v407
      %v447 = vunpack.c.l.b16 %v408
      %v448 = vunpack.c.l.b16 %v409
      %v449 = vunpack.c.l.b16 %v410
      %v450 = vunpack.c.l.b16 %v411
      %v451 = vunpack.c.l.b16 %v412
      %v452 = vunpack.c.l.b16 %v413
      %v453 = vunpack.c.l.b16 %v414
      %v454 = vunpack.c.l.b16 %v415
      %v455 = vunpack.c.l.b16 %v416
      %v456 = vunpack.c.l.b16 %v417
      %v457 = vunpack.c.l.b16 %v418
      %v458 = vunpack.c.l.b16 %v419
      %v459 = vpack.c.b16 %v444, %v443
      %v460 = vpack.c.b16 %v446, %v445
      %v461 = vpack.c.b16 %v448, %v447
      %v462 = vpack.c.b16 %v450, %v449
      %v463 = vpack.c.b16 %v452, %v451
      %v464 = vpack.c.b16 %v454, %v453
      %v465 = vpack.c.b16 %v456, %v455
      %v466 = vpack.c.b16 %v458, %v457
      %475 = vmatprep.subr.bf16.mxu0 0
      %476 = vmatpush1.bf16.msra.mxu0 %v466
      %477 = vmatprep.subr.bf16.mxu0 0
      %478 = vmatpush1.bf16.msra.mxu0 %v465
      %479 = vmatprep.subr.bf16.mxu0 0
      %480 = vmatpush1.bf16.msra.mxu0 %v464
      %481 = vmatprep.subr.bf16.mxu0 0
      %482 = vmatpush1.bf16.msra.mxu0 %v463
      %483 = vmatprep.subr.bf16.mxu0 0
      %484 = vmatpush1.bf16.msra.mxu0 %v462
      %485 = vmatprep.subr.bf16.mxu0 0
      %486 = vmatpush1.bf16.msra.mxu0 %v461
      %487 = vmatprep.subr.bf16.mxu0 0
      %488 = vmatpush1.bf16.msra.mxu0 %v460
      %489 = vmatprep.subr.bf16.mxu0 0
      %490 = vmatpush1.bf16.msra.mxu0 %v459
      %491 = vmatprep.subr.bf16.mxu0 0
      %492 = vmatpush2.bf16.msra.mxu0 0
      %493 = vmatprep.subr.bf16.mxu0 0
      %494 = vmatpush2.bf16.msra.mxu0 0
      %495 = vmatprep.subr.bf16.mxu0 0
      %496 = vmatpush2.bf16.msra.mxu0 0
      %497 = vmatprep.subr.bf16.mxu0 0
      %498 = vmatpush2.bf16.msra.mxu0 0
      %499 = vmatprep.subr.bf16.mxu0 0
      %500 = vmatpush2.bf16.msra.mxu0 0
      %501 = vmatprep.subr.bf16.mxu0 0
      %502 = vmatpush2.bf16.msra.mxu0 0
      %503 = vmatprep.subr.bf16.mxu0 0
      %504 = vmatpush2.bf16.msra.mxu0 0
      %505 = vmatprep.subr.bf16.mxu0 0
      %506 = vmatpush2.bf16.msra.mxu0 0
      %507 = vmatprep.mubr.bf16.mxu0 0
      %508 = vmatmul.mubr.bf16.gmra.mxu0 %v403
      %v509 = vpop.f32.mrf.mxu0
      %v510 = vadd.f32 %v425, %v509
      %v511 = vpop.f32.mrf.mxu0
      %v512 = vpop.f32.mrf.mxu0
      %v513 = vadd.f32 %v425, %v512
      %v514 = vpop.f32.mrf.mxu0
      %515 = vdwg.mxu0
      %v516 = vmax.f32 %v510, 0.0
      %v517 = vmax.f32 %v513, 0.0
      %p518 = scmp.gt.s32.totalorder %s24, 0
      %s519 = scalar_select %p518, 1, 0
      %s520 = scvt.s32.f32 %s519
      %p521 = scmp.lt.s32.totalorder %s24, 1
      %s522 = scalar_select %p521, 1, 0
      %s523 = scvt.s32.f32 %s522
      %v524 = vstv %s520
      %v525 = vmul.f32 %v516, %v524
      %v526 = vstv %s523
      %v527 = vmul.f32 %v517, %v526
      %vm528 = vcmask 1040384
      %v529 = vsel %vm528, %v525, %v516
      %v530 = vsel %vm528, %v517, %v527
      %v531 = vpack.c.bf16 %v530, %v529
      %v533 = vshrl.u32 %v531, 16
      %v535 = vshll.u32 %v531, 16
      %v537 = vrot.slane %v535, 1
      %v538 = vor.u32 %v533, %v537
      %v541 = vrot.slane %v531, 1
      %v543 = vld [vmem:[%s3] sm:$0xf]
      %v544 = vld [vmem:[%s3 + $0x4] sm:$0xf]
      %v545 = vld [vmem:[%s3 + $0x8] sm:$0xf]
      %v546 = vld [vmem:[%s3 + $0xc] sm:$0xf]
      %v547 = vld [vmem:[%s3 + $0x10] sm:$0xf]
      %v548 = vld [vmem:[%s3 + $0x14] sm:$0xf]
      %v549 = vld [vmem:[%s3 + $0x18] sm:$0xf]
      %v550 = vld [vmem:[%s3 + $0x1c] sm:$0xf]
      %v551 = vld [vmem:[%s3 + $0x20] sm:$0xf]
      %v552 = vld [vmem:[%s3 + $0x24] sm:$0xf]
      %v553 = vld [vmem:[%s3 + $0x28] sm:$0xf]
      %v554 = vld [vmem:[%s3 + $0x2c] sm:$0xf]
      %v555 = vld [vmem:[%s3 + $0x30] sm:$0xf]
      %v556 = vld [vmem:[%s3 + $0x34] sm:$0xf]
      %v557 = vld [vmem:[%s3 + $0x38] sm:$0xf]
      %v558 = vld [vmem:[%s3 + $0x3c] sm:$0xf]
      %v559 = vld [vmem:[%s3 + $0x40] sm:$0xf]
      %v560 = vld [vmem:[%s3 + $0x44] sm:$0xf]
      %v561 = vld [vmem:[%s3 + $0x48] sm:$0xf]
      %v562 = vld [vmem:[%s3 + $0x4c] sm:$0xf]
      %v563 = vld [vmem:[%s3 + $0x50] sm:$0xf]
      %v564 = vld [vmem:[%s3 + $0x54] sm:$0xf]
      %v565 = vld [vmem:[%s3 + $0x58] sm:$0xf]
      %v566 = vld [vmem:[%s3 + $0x5c] sm:$0xf]
      %v567 = vld [vmem:[%s3 + $0x60] sm:$0xf]
      %v568 = vld [vmem:[%s3 + $0x64] sm:$0xf]
      %v569 = vld [vmem:[%s3 + $0x68] sm:$0xf]
      %v570 = vld [vmem:[%s3 + $0x6c] sm:$0xf]
      %v571 = vld [vmem:[%s3 + $0x70] sm:$0xf]
      %v572 = vld [vmem:[%s3 + $0x74] sm:$0xf]
      %v573 = vld [vmem:[%s3 + $0x78] sm:$0xf]
      %v574 = vld [vmem:[%s3 + $0x7c] sm:$0xf]
      %v575 = vld [vmem:[%s3 + $0x80] sm:$0xf]
      %v576 = vld [vmem:[%s3 + $0x84] sm:$0xf]
      %v577 = vld [vmem:[%s3 + $0x88] sm:$0xf]
      %v578 = vld [vmem:[%s3 + $0x8c] sm:$0xf]
      %v579 = vld [vmem:[%s3 + $0x90] sm:$0xf]
      %v580 = vld [vmem:[%s3 + $0x94] sm:$0xf]
      %v581 = vld [vmem:[%s3 + $0x98] sm:$0xf]
      %v582 = vld [vmem:[%s3 + $0x9c] sm:$0xf]
      %v583 = vld [vmem:[%s3 + $0xa0] sm:$0xf]
      %v584 = vld [vmem:[%s3 + $0xa4] sm:$0xf]
      %v585 = vld [vmem:[%s3 + $0xa8] sm:$0xf]
      %v586 = vld [vmem:[%s3 + $0xac] sm:$0xf]
      %v587 = vld [vmem:[%s3 + $0xb0] sm:$0xf]
      %v588 = vld [vmem:[%s3 + $0xb4] sm:$0xf]
      %v589 = vld [vmem:[%s3 + $0xb8] sm:$0xf]
      %v590 = vld [vmem:[%s3 + $0xbc] sm:$0xf]
      %v591 = vld [vmem:[%s6] sm:$0x1]
      %v593 = vlaneseq
      %v594 = vshrl.u32 %v593, 7
      %v595 = vsub.s32 0, %v594
      %v596 = vrot.slane %v591, %v595
      %v646 = vunpack.c.l.b16 %v543
      %v647 = vunpack.c.l.b16 %v544
      %v648 = vunpack.c.l.b16 %v545
      %v649 = vunpack.c.l.b16 %v546
      %v650 = vunpack.c.l.b16 %v547
      %v651 = vunpack.c.l.b16 %v548
      %v652 = vunpack.c.l.b16 %v549
      %v653 = vunpack.c.l.b16 %v550
      %v654 = vunpack.c.l.b16 %v551
      %v655 = vunpack.c.l.b16 %v552
      %v656 = vunpack.c.l.b16 %v553
      %v657 = vunpack.c.l.b16 %v554
      %v658 = vunpack.c.l.b16 %v555
      %v659 = vunpack.c.l.b16 %v556
      %v660 = vunpack.c.l.b16 %v557
      %v661 = vunpack.c.l.b16 %v558
      %v662 = vunpack.c.l.b16 %v559
      %v663 = vunpack.c.l.b16 %v560
      %v664 = vunpack.c.l.b16 %v561
      %v665 = vunpack.c.l.b16 %v562
      %v666 = vunpack.c.l.b16 %v563
      %v667 = vunpack.c.l.b16 %v564
      %v668 = vunpack.c.l.b16 %v565
      %v669 = vunpack.c.l.b16 %v566
      %v670 = vunpack.c.l.b16 %v567
      %v671 = vunpack.c.l.b16 %v568
      %v672 = vunpack.c.l.b16 %v569
      %v673 = vunpack.c.l.b16 %v570
      %v674 = vunpack.c.l.b16 %v571
      %v675 = vunpack.c.l.b16 %v572
      %v676 = vunpack.c.l.b16 %v573
      %v677 = vunpack.c.l.b16 %v574
      %v678 = vunpack.c.l.b16 %v575
      %v679 = vunpack.c.l.b16 %v576
      %v680 = vunpack.c.l.b16 %v577
      %v681 = vunpack.c.l.b16 %v578
      %v682 = vunpack.c.l.b16 %v579
      %v683 = vunpack.c.l.b16 %v580
      %v684 = vunpack.c.l.b16 %v581
      %v685 = vunpack.c.l.b16 %v582
      %v686 = vunpack.c.l.b16 %v583
      %v687 = vunpack.c.l.b16 %v584
      %v688 = vunpack.c.l.b16 %v585
      %v689 = vunpack.c.l.b16 %v586
      %v690 = vunpack.c.l.b16 %v587
      %v691 = vunpack.c.l.b16 %v588
      %v692 = vunpack.c.l.b16 %v589
      %v693 = vunpack.c.l.b16 %v590
      %v694 = vpack.c.b16 %v647, %v646
      %v695 = vpack.c.b16 %v649, %v648
      %v696 = vpack.c.b16 %v651, %v650
      %v697 = vpack.c.b16 %v653, %v652
      %v698 = vpack.c.b16 %v655, %v654
      %v699 = vpack.c.b16 %v657, %v656
      %v700 = vpack.c.b16 %v659, %v658
      %v701 = vpack.c.b16 %v661, %v660
      %v702 = vpack.c.b16 %v663, %v662
      %v703 = vpack.c.b16 %v665, %v664
      %v704 = vpack.c.b16 %v667, %v666
      %v705 = vpack.c.b16 %v669, %v668
      %v706 = vpack.c.b16 %v671, %v670
      %v707 = vpack.c.b16 %v673, %v672
      %v708 = vpack.c.b16 %v675, %v674
      %v709 = vpack.c.b16 %v677, %v676
      %v710 = vpack.c.b16 %v679, %v678
      %v711 = vpack.c.b16 %v681, %v680
      %v712 = vpack.c.b16 %v683, %v682
      %v713 = vpack.c.b16 %v685, %v684
      %v714 = vpack.c.b16 %v687, %v686
      %v715 = vpack.c.b16 %v689, %v688
      %v716 = vpack.c.b16 %v691, %v690
      %v717 = vpack.c.b16 %v693, %v692
      %742 = vmatprep.subr.bf16.mxu0 0
      %743 = vmatpush1.bf16.msra.mxu0 %v701
      %744 = vmatprep.subr.bf16.mxu0 0
      %745 = vmatpush1.bf16.msra.mxu0 %v700
      %746 = vmatprep.subr.bf16.mxu0 0
      %747 = vmatpush1.bf16.msra.mxu0 %v699
      %748 = vmatprep.subr.bf16.mxu0 0
      %749 = vmatpush1.bf16.msra.mxu0 %v698
      %750 = vmatprep.subr.bf16.mxu0 0
      %751 = vmatpush1.bf16.msra.mxu0 %v697
      %752 = vmatprep.subr.bf16.mxu0 0
      %753 = vmatpush1.bf16.msra.mxu0 %v696
      %754 = vmatprep.subr.bf16.mxu0 0
      %755 = vmatpush1.bf16.msra.mxu0 %v695
      %756 = vmatprep.subr.bf16.mxu0 0
      %757 = vmatpush1.bf16.msra.mxu0 %v694
      %758 = vmatprep.subr.bf16.mxu0 0
      %759 = vmatpush2.bf16.msra.mxu0 %v709
      %760 = vmatprep.subr.bf16.mxu0 0
      %761 = vmatpush2.bf16.msra.mxu0 %v708
      %762 = vmatprep.subr.bf16.mxu0 0
      %763 = vmatpush2.bf16.msra.mxu0 %v707
      %764 = vmatprep.subr.bf16.mxu0 0
      %765 = vmatpush2.bf16.msra.mxu0 %v706
      %766 = vmatprep.subr.bf16.mxu0 0
      %767 = vmatpush2.bf16.msra.mxu0 %v705
      %768 = vmatprep.subr.bf16.mxu0 0
      %769 = vmatpush2.bf16.msra.mxu0 %v704
      %770 = vmatprep.subr.bf16.mxu0 0
      %771 = vmatpush2.bf16.msra.mxu0 %v703
      %772 = vmatprep.subr.bf16.mxu0 0
      %773 = vmatpush2.bf16.msra.mxu0 %v702
      %774 = vmatprep.mubr.bf16.mxu0 %v538
      %775 = vmatmul.mubr.bf16.gmra.mxu0 %v531
      %v776 = vpop.f32.mrf.mxu0
      %v777 = vadd.f32 %v596, %v776
      %v778 = vpop.f32.mrf.mxu0
      %v779 = vpop.f32.mrf.mxu0
      %v780 = vpop.f32.mrf.mxu0
      %781 = vdwg.mxu0
      %782 = vmatprep.subr.bf16.mxu0 0
      %783 = vmatpush1.bf16.msra.mxu0 %v717
      %784 = vmatprep.subr.bf16.mxu0 0
      %785 = vmatpush1.bf16.msra.mxu0 %v716
      %786 = vmatprep.subr.bf16.mxu0 0
      %787 = vmatpush1.bf16.msra.mxu0 %v715
      %788 = vmatprep.subr.bf16.mxu0 0
      %789 = vmatpush1.bf16.msra.mxu0 %v714
      %790 = vmatprep.subr.bf16.mxu0 0
      %791 = vmatpush1.bf16.msra.mxu0 %v713
      %792 = vmatprep.subr.bf16.mxu0 0
      %793 = vmatpush1.bf16.msra.mxu0 %v712
      %794 = vmatprep.subr.bf16.mxu0 0
      %795 = vmatpush1.bf16.msra.mxu0 %v711
      %796 = vmatprep.subr.bf16.mxu0 0
      %797 = vmatpush1.bf16.msra.mxu0 %v710
      %798 = vmatprep.subr.bf16.mxu0 0
      %799 = vmatpush2.bf16.msra.mxu0 0
      %800 = vmatprep.subr.bf16.mxu0 0
      %801 = vmatpush2.bf16.msra.mxu0 0
      %802 = vmatprep.subr.bf16.mxu0 0
      %803 = vmatpush2.bf16.msra.mxu0 0
      %804 = vmatprep.subr.bf16.mxu0 0
      %805 = vmatpush2.bf16.msra.mxu0 0
      %806 = vmatprep.subr.bf16.mxu0 0
      %807 = vmatpush2.bf16.msra.mxu0 0
      %808 = vmatprep.subr.bf16.mxu0 0
      %809 = vmatpush2.bf16.msra.mxu0 0
      %810 = vmatprep.subr.bf16.mxu0 0
      %811 = vmatpush2.bf16.msra.mxu0 0
      %812 = vmatprep.subr.bf16.mxu0 0
      %813 = vmatpush2.bf16.msra.mxu0 0
      %814 = vmatprep.mubr.bf16.mxu0 0
      %815 = vmatmul.mubr.bf16.gmra.mxu0 %v541
      %v816 = vpop.f32.mrf.mxu0
      %v817 = vadd.f32 %v777, %v816
      %v818 = vpop.f32.mrf.mxu0
      %v819 = vpop.f32.mrf.mxu0
      %v820 = vpop.f32.mrf.mxu0
      %821 = vdwg.mxu0
      %v822 = vmax.f32 %v817, 0.0
      %v823 = vpack.c.bf16 %v822, %v822
      %v824 = vld [vmem:[%s4] sm:$0xf]
      %v825 = vld [vmem:[%s4 + $0x4] sm:$0xf]
      %v826 = vld [vmem:[%s4 + $0x8] sm:$0xf]
      %v827 = vld [vmem:[%s4 + $0xc] sm:$0xf]
      %v828 = vld [vmem:[%s4 + $0x10] sm:$0xf]
      %v829 = vld [vmem:[%s4 + $0x14] sm:$0xf]
      %v830 = vld [vmem:[%s4 + $0x18] sm:$0xf]
      %v831 = vld [vmem:[%s4 + $0x1c] sm:$0xf]
      %v832 = vld [vmem:[%s4 + $0x20] sm:$0xf]
      %v833 = vld [vmem:[%s4 + $0x24] sm:$0xf]
      %v834 = vld [vmem:[%s4 + $0x28] sm:$0xf]
      %v835 = vld [vmem:[%s4 + $0x2c] sm:$0xf]
      %v836 = vld [vmem:[%s4 + $0x30] sm:$0xf]
      %v837 = vld [vmem:[%s4 + $0x34] sm:$0xf]
      %v838 = vld [vmem:[%s4 + $0x38] sm:$0xf]
      %v839 = vld [vmem:[%s4 + $0x3c] sm:$0xf]
      %v840 = vunpack.c.l.bf16 %v366
      %v841 = vld [vmem:[%s7] sm:$0x1]
      %v843 = vlaneseq
      %v844 = vshrl.u32 %v843, 7
      %v845 = vsub.s32 0, %v844
      %v846 = vrot.slane %v841, %v845
      %v864 = vunpack.c.l.b16 %v824
      %v865 = vunpack.c.l.b16 %v825
      %v866 = vunpack.c.l.b16 %v826
      %v867 = vunpack.c.l.b16 %v827
      %v868 = vunpack.c.l.b16 %v828
      %v869 = vunpack.c.l.b16 %v829
      %v870 = vunpack.c.l.b16 %v830
      %v871 = vunpack.c.l.b16 %v831
      %v872 = vunpack.c.l.b16 %v832
      %v873 = vunpack.c.l.b16 %v833
      %v874 = vunpack.c.l.b16 %v834
      %v875 = vunpack.c.l.b16 %v835
      %v876 = vunpack.c.l.b16 %v836
      %v877 = vunpack.c.l.b16 %v837
      %v878 = vunpack.c.l.b16 %v838
      %v879 = vunpack.c.l.b16 %v839
      %v880 = vpack.c.b16 %v865, %v864
      %v881 = vpack.c.b16 %v867, %v866
      %v882 = vpack.c.b16 %v869, %v868
      %v883 = vpack.c.b16 %v871, %v870
      %v884 = vpack.c.b16 %v873, %v872
      %v885 = vpack.c.b16 %v875, %v874
      %v886 = vpack.c.b16 %v877, %v876
      %v887 = vpack.c.b16 %v879, %v878
      %896 = vmatprep.subr.bf16.mxu0 0
      %897 = vmatpush1.bf16.msra.mxu0 %v887
      %898 = vmatprep.subr.bf16.mxu0 0
      %899 = vmatpush1.bf16.msra.mxu0 %v886
      %900 = vmatprep.subr.bf16.mxu0 0
      %901 = vmatpush1.bf16.msra.mxu0 %v885
      %902 = vmatprep.subr.bf16.mxu0 0
      %903 = vmatpush1.bf16.msra.mxu0 %v884
      %904 = vmatprep.subr.bf16.mxu0 0
      %905 = vmatpush1.bf16.msra.mxu0 %v883
      %906 = vmatprep.subr.bf16.mxu0 0
      %907 = vmatpush1.bf16.msra.mxu0 %v882
      %908 = vmatprep.subr.bf16.mxu0 0
      %909 = vmatpush1.bf16.msra.mxu0 %v881
      %910 = vmatprep.subr.bf16.mxu0 0
      %911 = vmatpush1.bf16.msra.mxu0 %v880
      %912 = vmatprep.subr.bf16.mxu0 0
      %913 = vmatpush2.bf16.msra.mxu0 0
      %914 = vmatprep.subr.bf16.mxu0 0
      %915 = vmatpush2.bf16.msra.mxu0 0
      %916 = vmatprep.subr.bf16.mxu0 0
      %917 = vmatpush2.bf16.msra.mxu0 0
      %918 = vmatprep.subr.bf16.mxu0 0
      %919 = vmatpush2.bf16.msra.mxu0 0
      %920 = vmatprep.subr.bf16.mxu0 0
      %921 = vmatpush2.bf16.msra.mxu0 0
      %922 = vmatprep.subr.bf16.mxu0 0
      %923 = vmatpush2.bf16.msra.mxu0 0
      %924 = vmatprep.subr.bf16.mxu0 0
      %925 = vmatpush2.bf16.msra.mxu0 0
      %926 = vmatprep.subr.bf16.mxu0 0
      %927 = vmatpush2.bf16.msra.mxu0 0
      %928 = vmatprep.mubr.bf16.mxu0 0
      %929 = vmatmul.mubr.bf16.gmra.mxu0 %v823
      %v930 = vpop.f32.mrf.mxu0
      %v931 = vadd.f32 %v846, %v930
      %v932 = vpop.f32.mrf.mxu0
      %v933 = vpop.f32.mrf.mxu0
      %v934 = vpop.f32.mrf.mxu0
      %935 = vdwg.mxu0
      %v936 = vadd.f32 %v931, %v840
      %v937 = vmax.f32 %v936, 0.0
      %938 = vst [vmem:[%s364] sm:$0xff] %v937
      %p939 = scmp.lt.s32.totalorder %s23, 1
      %s940 = scalar_select %p939, %s23, 1
      %p941 = scmp.lt.s32.totalorder %s24, 1
      %s942 = scalar_select %p941, %s24, 1
      %s943 = smul.addr %s940, 2
      %s944 = sadd.s32 %s942, %s943
      %s945 = smul.addr %s944, 8
      %s946 = scalar_lea.vmem %s8, %s945
      // Predicated region
      $region53: #{_bottleneck_impl.1} parent=51 // pred_check
        %p947 = pneg %p233
      $region54: #{_bottleneck_impl.1} parent=51 // pred_check_branch
        %949 = sbr.rel (%p947) target = $region56
      $region55: #{_bottleneck_impl.1} parent=51 // pred_region
        _
      $region56: #{_bottleneck_impl.1} parent=51 // pred_fallthru
        _
    $region52: #{_bottleneck_impl.1} parent=5 // pred_fallthru
      _
    %p950 = scmp.le.s32.totalorder 2, %s14
    // Predicated region
    $region57: #{_bottleneck_impl.1} parent=5 // pred_check
      %p951 = pneg %p950
    $region58: #{_bottleneck_impl.1} parent=5 // pred_check_branch
      %953 = sbr.rel (%p951) target = $region60
    $region59: #{_bottleneck_impl.1} parent=5 // pred_region
      %s954 = ssub.s32 %s14, 2
      // Predicated region
      $region61: #{_bottleneck_impl.1} parent=59 // pred_check
        %p955 = pneg %p239
      $region62: #{_bottleneck_impl.1} parent=59 // pred_check_branch
        %957 = sbr.rel (%p955) target = $region64
      $region63: #{_bottleneck_impl.1} parent=59 // pred_region
        %p958 = scmp.lt.s32.totalorder %s25, 1
        %s959 = scalar_select %p958, %s25, 1
        %p960 = scmp.lt.s32.totalorder %s26, 1
        %s961 = scalar_select %p960, %s26, 1
        %s962 = smul.addr %s959, 2
        %s963 = sadd.s32 %s961, %s962
        %s964 = smul.addr %s963, 8
        %s965 = scalar_lea.vmem %s8, %s964
      $region64: #{_bottleneck_impl.1} parent=59 // pred_fallthru
        _
    $region60: #{_bottleneck_impl.1} parent=5 // pred_fallthru
      _
  $region6: #{_bottleneck_impl.1} parent=0 // loop_footer
    %s18 = sadd.s32 1, %s14
  $region7: #{_bottleneck_impl.1} parent=0 // loop_footer_branch
    %13 = sbr.rel target = $region3
  $region8: #{_bottleneck_impl.1} parent=0 // loop_exit
    _

// kernel: _bottleneck_impl.1
$region0: #{_bottleneck_impl.1}
  #allocation0 [shape = 'u32[]', space=smem, size = 0x4, offset = 0x4, fixed_abs, tag = 'smem constant byte address 0x4 - core index']
  #allocation1 [shape = 'u32[144,128]{1,0:T(1,128)}', space=vmem, size = 0x12000, scoped, tag = 'internal scratch']
  %s0 = inlined_call_operand.vmem [shape: bf16[2,16,128], index: 0, kind: input, shape index: {}]
  %s1 = inlined_call_operand.vmem [shape: bf16[2,2,2,128], index: 1, kind: input, shape index: {}]
  %s2 = inlined_call_operand.vmem [shape: bf16[128,128], index: 2, kind: input, shape index: {}]
  %s3 = inlined_call_operand.vmem [shape: bf16[384,128], index: 3, kind: input, shape index: {}]
  %s4 = inlined_call_operand.vmem [shape: bf16[128,128], index: 4, kind: input, shape index: {}]
  %s5 = inlined_call_operand.vmem [shape: f32[1,128], index: 5, kind: input, shape index: {}]
  %s6 = inlined_call_operand.vmem [shape: f32[1,128], index: 6, kind: input, shape index: {}]
  %s7 = inlined_call_operand.vmem [shape: f32[1,128], index: 7, kind: input, shape index: {}]
  %s8 = inlined_call_operand.vmem [shape: f32[2,16,128], index: 8, kind: output, shape index: {}]
  %s9 = sld [smem:[#allocation0]]
  $region65: #{_bottleneck_impl.1} parent=0
    _
  %s11 = ssub.s32 1, %s9
  %s12 = scalar_select 0, %s11, %s9
  loop: start=0, step=1, limit=6
  $region2: #{_bottleneck_impl.1} parent=0 // loop_pre_header
    _
  $region3: #{_bottleneck_impl.1} parent=0 // loop_header
    %s14 = sphi 0, %s18
    %p15 = scmp.ge.s32.totalorder %s14, 6
    %s21 = sphi 0, %s33
    %s22 = sphi 0, %s29
    %s23 = sphi 0, %s21
    %s24 = sphi 0, %s22
    %s25 = sphi 0, %s23
    %s26 = sphi 0, %s24
    %s38 = sphi 0, %s40
    %s41 = sphi 0, %s38
    %s42 = sphi 0, %s41
    %s58 = sphi 0, %s42
    %s66 = sphi 0, %s68
    %s69 = sphi 0, %s66
    %s70 = sphi 0, %s69
    %s86 = sphi 0, %s70
    %s90 = sphi 0, %s90
    %s92 = sphi 0, %s90
    %s93 = sphi 0, %s92
    %s107 = sphi 0, %s93
    %s111 = sphi 0, %s111
    %s113 = sphi 0, %s111
    %s114 = sphi 0, %s113
    %s128 = sphi 0, %s114
    %s132 = sphi 0, %s132
    %s134 = sphi 0, %s132
    %s135 = sphi 0, %s134
    %s149 = sphi 0, %s135
    %s153 = sphi 0, %s153
    %s155 = sphi 0, %s153
    %s156 = sphi 0, %s155
    %s170 = sphi 0, %s156
    %s174 = sphi 0, %s174
    %s176 = sphi 0, %s174
    %s177 = sphi 0, %s176
    %s191 = sphi 0, %s177
    %s195 = sphi 0, %s195
    %s197 = sphi 0, %s195
    %s198 = sphi 0, %s197
    %s212 = sphi 0, %s198
    %s220 = sphi 0, %s222
    %s223 = sphi 0, %s220
    %s224 = sphi 0, %s223
    %s240 = sphi 0, %s224
  $region4: #{_bottleneck_impl.1} parent=0 // loop_header_branch
    %17 = sbr.rel (%p15) target = $region8
  $region5: #{_bottleneck_impl.1} parent=0 // loop_body
    %s19 = ssub.s32 %s14, 1
    %s20 = ssub.s32 %s14, 2
    %s27 = sadd.s32 1, %s22
    %p28 = scmp.ge.s32.totalorder %s27, 2
    %s29 = scalar_select %p28, 0, %s27
    %s30 = sadd.s32 1, %s21
    %s31 = scalar_select %p28, %s30, %s21
    %p32 = scmp.ge.s32.totalorder %s31, 2
    %s33 = scalar_select %p32, 0, %s31
    %s34 = ssub.s32 %s21, %s33
    %s35 = ssub.s32 %s22, %s29
    %s36 = sor.u32 %s34, %s35
    %p37 = scmp.eq.s32.totalorder %s36, 0
    %s39 = sadd.s32 %s38, 1
    %s40 = scalar_select %p37, %s38, %s39
    %p43 = pneg %p37
    %p44 = scmp.eq.s32.totalorder %s14, 3
    %p45 = por %p43, %p44
    %p46 = scmp.ne.s32.totalorder %s38, %s41
    %p47 = scmp.eq.s32.totalorder %s14, 0
    %p48 = por %p46, %p47
    %p49 = scmp.ne.s32.totalorder %s38, %s41
    %p50 = scmp.eq.s32.totalorder %s19, 3
    %p51 = por %p49, %p50
    %p52 = scmp.ne.s32.totalorder %s41, %s42
    %p53 = scmp.eq.s32.totalorder %s19, 0
    %p54 = por %p52, %p53
    %p55 = scmp.ne.s32.totalorder %s41, %s42
    %p56 = scmp.eq.s32.totalorder %s20, 3
    %p57 = por %p55, %p56
    %p59 = scmp.ne.s32.totalorder %s42, %s58
    %p60 = scmp.eq.s32.totalorder %s20, 0
    %p61 = por %p59, %p60
    %s62 = ssub.s32 %s21, %s33
    %s63 = ssub.s32 %s22, %s29
    %s64 = sor.u32 %s62, %s63
    %p65 = scmp.eq.s32.totalorder %s64, 0
    %s67 = sadd.s32 %s66, 1
    %s68 = scalar_select %p65, %s66, %s67
    %p71 = pneg %p65
    %p72 = scmp.eq.s32.totalorder %s14, 3
    %p73 = por %p71, %p72
    %p74 = scmp.ne.s32.totalorder %s66, %s69
    %p75 = scmp.eq.s32.totalorder %s14, 0
    %p76 = por %p74, %p75
    %p77 = scmp.ne.s32.totalorder %s66, %s69
    %p78 = scmp.eq.s32.totalorder %s19, 3
    %p79 = por %p77, %p78
    %p80 = scmp.ne.s32.totalorder %s69, %s70
    %p81 = scmp.eq.s32.totalorder %s19, 0
    %p82 = por %p80, %p81
    %p83 = scmp.ne.s32.totalorder %s69, %s70
    %p84 = scmp.eq.s32.totalorder %s20, 3
    %p85 = por %p83, %p84
    %p87 = scmp.ne.s32.totalorder %s70, %s86
    %p88 = scmp.eq.s32.totalorder %s20, 0
    %p89 = por %p87, %p88
    %s91 = sadd.s32 %s90, 1
    %p94 = scmp.eq.s32.totalorder %s14, 3
    %p95 = scmp.ne.s32.totalorder %s90, %s92
    %p96 = scmp.eq.s32.totalorder %s14, 0
    %p97 = por %p95, %p96
    %p98 = scmp.ne.s32.totalorder %s90, %s92
    %p99 = scmp.eq.s32.totalorder %s19, 3
    %p100 = por %p98, %p99
    %p101 = scmp.ne.s32.totalorder %s92, %s93
    %p102 = scmp.eq.s32.totalorder %s19, 0
    %p103 = por %p101, %p102
    %p104 = scmp.ne.s32.totalorder %s92, %s93
    %p105 = scmp.eq.s32.totalorder %s20, 3
    %p106 = por %p104, %p105
    %p108 = scmp.ne.s32.totalorder %s93, %s107
    %p109 = scmp.eq.s32.totalorder %s20, 0
    %p110 = por %p108, %p109
    %s112 = sadd.s32 %s111, 1
    %p115 = scmp.eq.s32.totalorder %s14, 3
    %p116 = scmp.ne.s32.totalorder %s111, %s113
    %p117 = scmp.eq.s32.totalorder %s14, 0
    %p118 = por %p116, %p117
    %p119 = scmp.ne.s32.totalorder %s111, %s113
    %p120 = scmp.eq.s32.totalorder %s19, 3
    %p121 = por %p119, %p120
    %p122 = scmp.ne.s32.totalorder %s113, %s114
    %p123 = scmp.eq.s32.totalorder %s19, 0
    %p124 = por %p122, %p123
    %p125 = scmp.ne.s32.totalorder %s113, %s114
    %p126 = scmp.eq.s32.totalorder %s20, 3
    %p127 = por %p125, %p126
    %p129 = scmp.ne.s32.totalorder %s114, %s128
    %p130 = scmp.eq.s32.totalorder %s20, 0
    %p131 = por %p129, %p130
    %s133 = sadd.s32 %s132, 1
    %p136 = scmp.eq.s32.totalorder %s14, 3
    %p137 = scmp.ne.s32.totalorder %s132, %s134
    %p138 = scmp.eq.s32.totalorder %s14, 0
    %p139 = por %p137, %p138
    %p140 = scmp.ne.s32.totalorder %s132, %s134
    %p141 = scmp.eq.s32.totalorder %s19, 3
    %p142 = por %p140, %p141
    %p143 = scmp.ne.s32.totalorder %s134, %s135
    %p144 = scmp.eq.s32.totalorder %s19, 0
    %p145 = por %p143, %p144
    %p146 = scmp.ne.s32.totalorder %s134, %s135
    %p147 = scmp.eq.s32.totalorder %s20, 3
    %p148 = por %p146, %p147
    %p150 = scmp.ne.s32.totalorder %s135, %s149
    %p151 = scmp.eq.s32.totalorder %s20, 0
    %p152 = por %p150, %p151
    %s154 = sadd.s32 %s153, 1
    %p157 = scmp.eq.s32.totalorder %s14, 3
    %p158 = scmp.ne.s32.totalorder %s153, %s155
    %p159 = scmp.eq.s32.totalorder %s14, 0
    %p160 = por %p158, %p159
    %p161 = scmp.ne.s32.totalorder %s153, %s155
    %p162 = scmp.eq.s32.totalorder %s19, 3
    %p163 = por %p161, %p162
    %p164 = scmp.ne.s32.totalorder %s155, %s156
    %p165 = scmp.eq.s32.totalorder %s19, 0
    %p166 = por %p164, %p165
    %p167 = scmp.ne.s32.totalorder %s155, %s156
    %p168 = scmp.eq.s32.totalorder %s20, 3
    %p169 = por %p167, %p168
    %p171 = scmp.ne.s32.totalorder %s156, %s170
    %p172 = scmp.eq.s32.totalorder %s20, 0
    %p173 = por %p171, %p172
    %s175 = sadd.s32 %s174, 1
    %p178 = scmp.eq.s32.totalorder %s14, 3
    %p179 = scmp.ne.s32.totalorder %s174, %s176
    %p180 = scmp.eq.s32.totalorder %s14, 0
    %p181 = por %p179, %p180
    %p182 = scmp.ne.s32.totalorder %s174, %s176
    %p183 = scmp.eq.s32.totalorder %s19, 3
    %p184 = por %p182, %p183
    %p185 = scmp.ne.s32.totalorder %s176, %s177
    %p186 = scmp.eq.s32.totalorder %s19, 0
    %p187 = por %p185, %p186
    %p188 = scmp.ne.s32.totalorder %s176, %s177
    %p189 = scmp.eq.s32.totalorder %s20, 3
    %p190 = por %p188, %p189
    %p192 = scmp.ne.s32.totalorder %s177, %s191
    %p193 = scmp.eq.s32.totalorder %s20, 0
    %p194 = por %p192, %p193
    %s196 = sadd.s32 %s195, 1
    %p199 = scmp.eq.s32.totalorder %s14, 3
    %p200 = scmp.ne.s32.totalorder %s195, %s197
    %p201 = scmp.eq.s32.totalorder %s14, 0
    %p202 = por %p200, %p201
    %p203 = scmp.ne.s32.totalorder %s195, %s197
    %p204 = scmp.eq.s32.totalorder %s19, 3
    %p205 = por %p203, %p204
    %p206 = scmp.ne.s32.totalorder %s197, %s198
    %p207 = scmp.eq.s32.totalorder %s19, 0
    %p208 = por %p206, %p207
    %p209 = scmp.ne.s32.totalorder %s197, %s198
    %p210 = scmp.eq.s32.totalorder %s20, 3
    %p211 = por %p209, %p210
    %p213 = scmp.ne.s32.totalorder %s198, %s212
    %p214 = scmp.eq.s32.totalorder %s20, 0
    %p215 = por %p213, %p214
    %s216 = ssub.s32 %s21, %s33
    %s217 = ssub.s32 %s22, %s29
    %s218 = sor.u32 %s216, %s217
    %p219 = scmp.eq.s32.totalorder %s218, 0
    %s221 = sadd.s32 %s220, 1
    %s222 = scalar_select %p219, %s220, %s221
    %p225 = pneg %p219
    %p226 = scmp.eq.s32.totalorder %s14, 3
    %p227 = por %p225, %p226
    %p228 = scmp.ne.s32.totalorder %s220, %s223
    %p229 = scmp.eq.s32.totalorder %s14, 0
    %p230 = por %p228, %p229
    %p231 = scmp.ne.s32.totalorder %s220, %s223
    %p232 = scmp.eq.s32.totalorder %s19, 3
    %p233 = por %p231, %p232
    %p234 = scmp.ne.s32.totalorder %s223, %s224
    %p235 = scmp.eq.s32.totalorder %s19, 0
    %p236 = por %p234, %p235
    %p237 = scmp.ne.s32.totalorder %s223, %s224
    %p238 = scmp.eq.s32.totalorder %s20, 3
    %p239 = por %p237, %p238
    %p241 = scmp.ne.s32.totalorder %s224, %s240
    %p242 = scmp.eq.s32.totalorder %s20, 0
    %p243 = por %p241, %p242
    %p244 = scmp.le.s32.totalorder 1, %s14
    %p245 = scmp.lt.s32.totalorder %s14, 5
    %p246 = pnand %p244, %p245
    %p247 = pneg %p246
    // Predicated region
    $region9: #{_bottleneck_impl.1} parent=5 // pred_check
      _
    $region10: #{_bottleneck_impl.1} parent=5 // pred_check_branch
      %249 = sbr.rel (%p246) target = $region12
    $region11: #{_bottleneck_impl.1} parent=5 // pred_region
      %s250 = ssub.s32 %s14, 1
      // Predicated region
      $region13: #{_bottleneck_impl.1} parent=11 // pred_check
        %p251 = pneg %p103
      $region14: #{_bottleneck_impl.1} parent=11 // pred_check_branch
        %253 = sbr.rel (%p251) target = $region16
      $region15: #{_bottleneck_impl.1} parent=11 // pred_region
        _
      $region16: #{_bottleneck_impl.1} parent=11 // pred_fallthru
        _
      // Predicated region
      $region17: #{_bottleneck_impl.1} parent=11 // pred_check
        %p254 = pneg %p124
      $region18: #{_bottleneck_impl.1} parent=11 // pred_check_branch
        %256 = sbr.rel (%p254) target = $region20
      $region19: #{_bottleneck_impl.1} parent=11 // pred_region
        _
      $region20: #{_bottleneck_impl.1} parent=11 // pred_fallthru
        _
      // Predicated region
      $region21: #{_bottleneck_impl.1} parent=11 // pred_check
        %p257 = pneg %p145
      $region22: #{_bottleneck_impl.1} parent=11 // pred_check_branch
        %259 = sbr.rel (%p257) target = $region24
      $region23: #{_bottleneck_impl.1} parent=11 // pred_region
        _
      $region24: #{_bottleneck_impl.1} parent=11 // pred_fallthru
        _
      // Predicated region
      $region25: #{_bottleneck_impl.1} parent=11 // pred_check
        %p260 = pneg %p166
      $region26: #{_bottleneck_impl.1} parent=11 // pred_check_branch
        %262 = sbr.rel (%p260) target = $region28
      $region27: #{_bottleneck_impl.1} parent=11 // pred_region
        _
      $region28: #{_bottleneck_impl.1} parent=11 // pred_fallthru
        _
      // Predicated region
      $region29: #{_bottleneck_impl.1} parent=11 // pred_check
        %p263 = pneg %p187
      $region30: #{_bottleneck_impl.1} parent=11 // pred_check_branch
        %265 = sbr.rel (%p263) target = $region32
      $region31: #{_bottleneck_impl.1} parent=11 // pred_region
        _
      $region32: #{_bottleneck_impl.1} parent=11 // pred_fallthru
        _
      // Predicated region
      $region33: #{_bottleneck_impl.1} parent=11 // pred_check
        %p266 = pneg %p208
      $region34: #{_bottleneck_impl.1} parent=11 // pred_check_branch
        %268 = sbr.rel (%p266) target = $region36
      $region35: #{_bottleneck_impl.1} parent=11 // pred_region
        _
      $region36: #{_bottleneck_impl.1} parent=11 // pred_fallthru
        _
    $region12: #{_bottleneck_impl.1} parent=5 // pred_fallthru
      _
    %p269 = scmp.lt.s32.totalorder %s14, 4
    // Predicated region
    $region37: #{_bottleneck_impl.1} parent=5 // pred_check
      %p270 = pneg %p269
    $region38: #{_bottleneck_impl.1} parent=5 // pred_check_branch
      %272 = sbr.rel (%p270) target = $region40
    $region39: #{_bottleneck_impl.1} parent=5 // pred_region
      // Predicated region
      $region41: #{_bottleneck_impl.1} parent=39 // pred_check
        %p273 = pneg %p48
      $region42: #{_bottleneck_impl.1} parent=39 // pred_check_branch
        %275 = sbr.rel (%p273) target = $region44
      $region43: #{_bottleneck_impl.1} parent=39 // pred_region
        %p276 = scmp.lt.s32.totalorder %s21, 1
        %s277 = scalar_select %p276, %s21, 1
        %p278 = scmp.lt.s32.totalorder %s22, 1
        %s279 = scalar_select %p278, %s22, 1
        %s280 = smul.addr %s277, 2
        %s281 = sadd.s32 %s279, %s280
        %s282 = smul.addr %s281, 4
        %s283 = scalar_lea.vmem %s0, %s282
      $region44: #{_bottleneck_impl.1} parent=39 // pred_fallthru
        _
      // Predicated region
      $region45: #{_bottleneck_impl.1} parent=39 // pred_check
        %p284 = pneg %p76
      $region46: #{_bottleneck_impl.1} parent=39 // pred_check_branch
        %286 = sbr.rel (%p284) target = $region48
      $region47: #{_bottleneck_impl.1} parent=39 // pred_region
        %p287 = scmp.lt.s32.totalorder %s21, 1
        %s288 = scalar_select %p287, %s21, 1
        %p289 = scmp.lt.s32.totalorder %s22, 1
        %s290 = scalar_select %p289, %s22, 1
        %s291 = smul.addr %s288, 2
        %s292 = sadd.s32 %s290, %s291
        %s293 = scalar_lea.vmem %s1, %s292
      $region48: #{_bottleneck_impl.1} parent=39 // pred_fallthru
        _
    $region40: #{_bottleneck_impl.1} parent=5 // pred_fallthru
      _
    %p294 = scmp.le.s32.totalorder 1, %s14
    %p295 = scmp.lt.s32.totalorder %s14, 5
    %p296 = pnand %p294, %p295
    %p297 = pneg %p296
    // Predicated region
    $region49: #{_bottleneck_impl.1} parent=5 // pred_check
      _
    $region50: #{_bottleneck_impl.1} parent=5 // pred_check_branch
      %299 = sbr.rel (%p296) target = $region52
    $region51: #{_bottleneck_impl.1} parent=5 // pred_region
      %s300 = ssub.s32 %s14, 1
      %p301 = scmp.lt.s32.totalorder %s23, 1
      %s302 = scalar_select %p301, %s23, 1
      %p303 = scmp.lt.s32.totalorder %s24, 1
      %s304 = scalar_select %p303, %s24, 1
      %s305 = smul.addr %s302, 2
      %s306 = sadd.s32 %s304, %s305
      %s307 = smul.addr %s306, 4
      %s308 = scalar_lea.vmem %s0, %s307
      %p309 = pneg %p54
      %p310 = pneg %p51
      %p311 = scmp.lt.s32.totalorder %s23, 1
      %s312 = scalar_select %p311, %s23, 1
      %p313 = scmp.lt.s32.totalorder %s24, 1
      %s314 = scalar_select %p313, %s24, 1
      %s315 = smul.addr %s312, 2
      %s316 = sadd.s32 %s314, %s315
      %s317 = scalar_lea.vmem %s1, %s316
      %p318 = pneg %p82
      %p319 = pneg %p79
      %p320 = pneg %p103
      %p321 = pneg %p100
      %p322 = pneg %p124
      %p323 = pneg %p121
      %p324 = pneg %p145
      %p325 = pneg %p142
      %p326 = pneg %p166
      %p327 = pneg %p163
      %p328 = pneg %p187
      %p329 = pneg %p184
      %p330 = pneg %p208
      %p331 = pneg %p205
      %p332 = pneg %p236
      %p333 = pneg %p233
      %p334 = scmp.lt.s32.totalorder %s23, 1
      %s335 = scalar_select %p334, %s23, 1
      %p336 = scmp.lt.s32.totalorder %s24, 1
      %s337 = scalar_select %p336, %s24, 1
      %s338 = smul.addr %s335, 2
      %s339 = sadd.s32 %s337, %s338
      %s340 = smul.addr %s339, 8
      %s341 = scalar_lea.vmem %s8, %s340
      %p342 = scmp.lt.s32.totalorder %s23, 1
      %s343 = scalar_select %p342, %s23, 1
      %p344 = scmp.lt.s32.totalorder %s24, 1
      %s345 = scalar_select %p344, %s24, 1
      %s346 = smul.addr %s343, 2
      %s347 = sadd.s32 %s345, %s346
      %s348 = smul.addr %s347, 4
      %s349 = scalar_lea.vmem %s0, %s348
      %p350 = scmp.lt.s32.totalorder %s23, 1
      %s351 = scalar_select %p350, %s23, 1
      %p352 = scmp.lt.s32.totalorder %s24, 1
      %s353 = scalar_select %p352, %s24, 1
      %s354 = smul.addr %s351, 2
      %s355 = sadd.s32 %s353, %s354
      %s356 = scalar_lea.vmem %s1, %s355
      %p357 = scmp.lt.s32.totalorder %s23, 1
      %s358 = scalar_select %p357, %s23, 1
      %p359 = scmp.lt.s32.totalorder %s24, 1
      %s360 = scalar_select %p359, %s24, 1
      %s361 = smul.addr %s358, 2
      %s362 = sadd.s32 %s360, %s361
      %s363 = smul.addr %s362, 8
      %s364 = scalar_lea.vmem %s8, %s363
      %v366 = vld [vmem:[%s349] sm:$0xf]
      %v367 = vld [vmem:[%s356] sm:$0x1]
      %v369 = vunpack.c.l.b16 %v366
      %v370 = vpack.c.b16 %v369, %v369
      %v372 = vshrl.u32 %v370, 16
      %v374 = vrot.slane %v372, 7
      %v375 = vshll.u32 %v370, 16
      %v377 = vor.u32 %v374, %v375
      %v381 = vunpack.c.l.s4 1966171168
      %v382 = vunpack.c.0.s8 %v381
      %v383 = vlaneseq
      %v384 = vshrl.u32 %v383, 7
      %v385 = vsub.s32 %v382, %v384
      %v386 = vrot.slane %v367, %v385
      %v388 = vunpack.c.l.s4 1966171168
      %v389 = vunpack.c.0.s8 %v388
      %v390 = vlaneseq
      %v391 = vshrl.u32 %v390, 7
      %v392 = vsub.s32 %v389, %v391
      %v393 = vrot.slane %v386, %v392
      %v394 = vcombine.low %v393, %v393
      %vm396 = vcmask 1040384
      %vm397 = vsmask.f32 256
      %vm398 = vmand %vm396, %vm397
      %v399 = vsel %vm398, %v367, %v377
      %vm400 = vcmask 1044480
      %vm401 = vsmask.f32 4352
      %vm402 = vmand %vm400, %vm401
      %v403 = vsel %vm402, %v399, %v394
      %v404 = vld [vmem:[%s2] sm:$0xf]
      %v405 = vld [vmem:[%s2 + $0x4] sm:$0xf]
      %v406 = vld [vmem:[%s2 + $0x8] sm:$0xf]
      %v407 = vld [vmem:[%s2 + $0xc] sm:$0xf]
      %v408 = vld [vmem:[%s2 + $0x10] sm:$0xf]
      %v409 = vld [vmem:[%s2 + $0x14] sm:$0xf]
      %v410 = vld [vmem:[%s2 + $0x18] sm:$0xf]
      %v411 = vld [vmem:[%s2 + $0x1c] sm:$0xf]
      %v412 = vld [vmem:[%s2 + $0x20] sm:$0xf]
      %v413 = vld [vmem:[%s2 + $0x24] sm:$0xf]
      %v414 = vld [vmem:[%s2 + $0x28] sm:$0xf]
      %v415 = vld [vmem:[%s2 + $0x2c] sm:$0xf]
      %v416 = vld [vmem:[%s2 + $0x30] sm:$0xf]
      %v417 = vld [vmem:[%s2 + $0x34] sm:$0xf]
      %v418 = vld [vmem:[%s2 + $0x38] sm:$0xf]
      %v419 = vld [vmem:[%s2 + $0x3c] sm:$0xf]
      %v420 = vld [vmem:[%s5] sm:$0x1]
      %v422 = vlaneseq
      %v423 = vshrl.u32 %v422, 7
      %v424 = vsub.s32 0, %v423
      %v425 = vrot.slane %v420, %v424
      %v443 = vunpack.c.l.b16 %v404
      %v444 = vunpack.c.l.b16 %v405
      %v445 = vunpack.c.l.b16 %v406
      %v446 = vunpack.c.l.b16 %v407
      %v447 = vunpack.c.l.b16 %v408
      %v448 = vunpack.c.l.b16 %v409
      %v449 = vunpack.c.l.b16 %v410
      %v450 = vunpack.c.l.b16 %v411
      %v451 = vunpack.c.l.b16 %v412
      %v452 = vunpack.c.l.b16 %v413
      %v453 = vunpack.c.l.b16 %v414
      %v454 = vunpack.c.l.b16 %v415
      %v455 = vunpack.c.l.b16 %v416
      %v456 = vunpack.c.l.b16 %v417
      %v457 = vunpack.c.l.b16 %v418
      %v458 = vunpack.c.l.b16 %v419
      %v459 = vpack.c.b16 %v444, %v443
      %v460 = vpack.c.b16 %v446, %v445
      %v461 = vpack.c.b16 %v448, %v447
      %v462 = vpack.c.b16 %v450, %v449
      %v463 = vpack.c.b16 %v452, %v451
      %v464 = vpack.c.b16 %v454, %v453
      %v465 = vpack.c.b16 %v456, %v455
      %v466 = vpack.c.b16 %v458, %v457
      %475 = vmatprep.subr.bf16.mxu0 0
      %476 = vmatpush1.bf16.msra.mxu0 %v466
      %477 = vmatprep.subr.bf16.mxu0 0
      %478 = vmatpush1.bf16.msra.mxu0 %v465
      %479 = vmatprep.subr.bf16.mxu0 0
      %480 = vmatpush1.bf16.msra.mxu0 %v464
      %481 = vmatprep.subr.bf16.mxu0 0
      %482 = vmatpush1.bf16.msra.mxu0 %v463
      %483 = vmatprep.subr.bf16.mxu0 0
      %484 = vmatpush1.bf16.msra.mxu0 %v462
      %485 = vmatprep.subr.bf16.mxu0 0
      %486 = vmatpush1.bf16.msra.mxu0 %v461
      %487 = vmatprep.subr.bf16.mxu0 0
      %488 = vmatpush1.bf16.msra.mxu0 %v460
      %489 = vmatprep.subr.bf16.mxu0 0
      %490 = vmatpush1.bf16.msra.mxu0 %v459
      %491 = vmatprep.subr.bf16.mxu0 0
      %492 = vmatpush2.bf16.msra.mxu0 0
      %493 = vmatprep.subr.bf16.mxu0 0
      %494 = vmatpush2.bf16.msra.mxu0 0
      %495 = vmatprep.subr.bf16.mxu0 0
      %496 = vmatpush2.bf16.msra.mxu0 0
      %497 = vmatprep.subr.bf16.mxu0 0
      %498 = vmatpush2.bf16.msra.mxu0 0
      %499 = vmatprep.subr.bf16.mxu0 0
      %500 = vmatpush2.bf16.msra.mxu0 0
      %501 = vmatprep.subr.bf16.mxu0 0
      %502 = vmatpush2.bf16.msra.mxu0 0
      %503 = vmatprep.subr.bf16.mxu0 0
      %504 = vmatpush2.bf16.msra.mxu0 0
      %505 = vmatprep.subr.bf16.mxu0 0
      %506 = vmatpush2.bf16.msra.mxu0 0
      %507 = vmatprep.mubr.bf16.mxu0 0
      %508 = vmatmul.mubr.bf16.gmra.mxu0 %v403
      %v509 = vpop.f32.mrf.mxu0
      %v510 = vadd.f32 %v425, %v509
      %v511 = vpop.f32.mrf.mxu0
      %v512 = vpop.f32.mrf.mxu0
      %v513 = vadd.f32 %v425, %v512
      %v514 = vpop.f32.mrf.mxu0
      %515 = vdwg.mxu0
      %v516 = vmax.f32 %v510, 0.0
      %v517 = vmax.f32 %v513, 0.0
      %p518 = scmp.gt.s32.totalorder %s24, 0
      %s519 = scalar_select %p518, 1, 0
      %s520 = scvt.s32.f32 %s519
      %p521 = scmp.lt.s32.totalorder %s24, 1
      %s522 = scalar_select %p521, 1, 0
      %s523 = scvt.s32.f32 %s522
      %v524 = vstv %s520
      %v525 = vmul.f32 %v516, %v524
      %v526 = vstv %s523
      %v527 = vmul.f32 %v517, %v526
      %vm528 = vcmask 1040384
      %v529 = vsel %vm528, %v525, %v516
      %v530 = vsel %vm528, %v517, %v527
      %v531 = vpack.c.bf16 %v530, %v529
      %v533 = vshrl.u32 %v531, 16
      %v535 = vshll.u32 %v531, 16
      %v537 = vrot.slane %v535, 1
      %v538 = vor.u32 %v533, %v537
      %v541 = vrot.slane %v531, 1
      %v543 = vld [vmem:[%s3] sm:$0xf]
      %v544 = vld [vmem:[%s3 + $0x4] sm:$0xf]
      %v545 = vld [vmem:[%s3 + $0x8] sm:$0xf]
      %v546 = vld [vmem:[%s3 + $0xc] sm:$0xf]
      %v547 = vld [vmem:[%s3 + $0x10] sm:$0xf]
      %v548 = vld [vmem:[%s3 + $0x14] sm:$0xf]
      %v549 = vld [vmem:[%s3 + $0x18] sm:$0xf]
      %v550 = vld [vmem:[%s3 + $0x1c] sm:$0xf]
      %v551 = vld [vmem:[%s3 + $0x20] sm:$0xf]
      %v552 = vld [vmem:[%s3 + $0x24] sm:$0xf]
      %v553 = vld [vmem:[%s3 + $0x28] sm:$0xf]
      %v554 = vld [vmem:[%s3 + $0x2c] sm:$0xf]
      %v555 = vld [vmem:[%s3 + $0x30] sm:$0xf]
      %v556 = vld [vmem:[%s3 + $0x34] sm:$0xf]
      %v557 = vld [vmem:[%s3 + $0x38] sm:$0xf]
      %v558 = vld [vmem:[%s3 + $0x3c] sm:$0xf]
      %v559 = vld [vmem:[%s3 + $0x40] sm:$0xf]
      %v560 = vld [vmem:[%s3 + $0x44] sm:$0xf]
      %v561 = vld [vmem:[%s3 + $0x48] sm:$0xf]
      %v562 = vld [vmem:[%s3 + $0x4c] sm:$0xf]
      %v563 = vld [vmem:[%s3 + $0x50] sm:$0xf]
      %v564 = vld [vmem:[%s3 + $0x54] sm:$0xf]
      %v565 = vld [vmem:[%s3 + $0x58] sm:$0xf]
      %v566 = vld [vmem:[%s3 + $0x5c] sm:$0xf]
      %v567 = vld [vmem:[%s3 + $0x60] sm:$0xf]
      %v568 = vld [vmem:[%s3 + $0x64] sm:$0xf]
      %v569 = vld [vmem:[%s3 + $0x68] sm:$0xf]
      %v570 = vld [vmem:[%s3 + $0x6c] sm:$0xf]
      %v571 = vld [vmem:[%s3 + $0x70] sm:$0xf]
      %v572 = vld [vmem:[%s3 + $0x74] sm:$0xf]
      %v573 = vld [vmem:[%s3 + $0x78] sm:$0xf]
      %v574 = vld [vmem:[%s3 + $0x7c] sm:$0xf]
      %v575 = vld [vmem:[%s3 + $0x80] sm:$0xf]
      %v576 = vld [vmem:[%s3 + $0x84] sm:$0xf]
      %v577 = vld [vmem:[%s3 + $0x88] sm:$0xf]
      %v578 = vld [vmem:[%s3 + $0x8c] sm:$0xf]
      %v579 = vld [vmem:[%s3 + $0x90] sm:$0xf]
      %v580 = vld [vmem:[%s3 + $0x94] sm:$0xf]
      %v581 = vld [vmem:[%s3 + $0x98] sm:$0xf]
      %v582 = vld [vmem:[%s3 + $0x9c] sm:$0xf]
      %v583 = vld [vmem:[%s3 + $0xa0] sm:$0xf]
      %v584 = vld [vmem:[%s3 + $0xa4] sm:$0xf]
      %v585 = vld [vmem:[%s3 + $0xa8] sm:$0xf]
      %v586 = vld [vmem:[%s3 + $0xac] sm:$0xf]
      %v587 = vld [vmem:[%s3 + $0xb0] sm:$0xf]
      %v588 = vld [vmem:[%s3 + $0xb4] sm:$0xf]
      %v589 = vld [vmem:[%s3 + $0xb8] sm:$0xf]
      %v590 = vld [vmem:[%s3 + $0xbc] sm:$0xf]
      %v591 = vld [vmem:[%s6] sm:$0x1]
      %v593 = vlaneseq
      %v594 = vshrl.u32 %v593, 7
      %v595 = vsub.s32 0, %v594
      %v596 = vrot.slane %v591, %v595
      %v646 = vunpack.c.l.b16 %v543
      %v647 = vunpack.c.l.b16 %v544
      %v648 = vunpack.c.l.b16 %v545
      %v649 = vunpack.c.l.b16 %v546
      %v650 = vunpack.c.l.b16 %v547
      %v651 = vunpack.c.l.b16 %v548
      %v652 = vunpack.c.l.b16 %v549
      %v653 = vunpack.c.l.b16 %v550
      %v654 = vunpack.c.l.b16 %v551
      %v655 = vunpack.c.l.b16 %v552
      %v656 = vunpack.c.l.b16 %v553
      %v657 = vunpack.c.l.b16 %v554
      %v658 = vunpack.c.l.b16 %v555
      %v659 = vunpack.c.l.b16 %v556
      %v660 = vunpack.c.l.b16 %v557
      %v661 = vunpack.c.l.b16 %v558
      %v662 = vunpack.c.l.b16 %v559
      %v663 = vunpack.c.l.b16 %v560
      %v664 = vunpack.c.l.b16 %v561
      %v665 = vunpack.c.l.b16 %v562
      %v666 = vunpack.c.l.b16 %v563
      %v667 = vunpack.c.l.b16 %v564
      %v668 = vunpack.c.l.b16 %v565
      %v669 = vunpack.c.l.b16 %v566
      %v670 = vunpack.c.l.b16 %v567
      %v671 = vunpack.c.l.b16 %v568
      %v672 = vunpack.c.l.b16 %v569
      %v673 = vunpack.c.l.b16 %v570
      %v674 = vunpack.c.l.b16 %v571
      %v675 = vunpack.c.l.b16 %v572
      %v676 = vunpack.c.l.b16 %v573
      %v677 = vunpack.c.l.b16 %v574
      %v678 = vunpack.c.l.b16 %v575
      %v679 = vunpack.c.l.b16 %v576
      %v680 = vunpack.c.l.b16 %v577
      %v681 = vunpack.c.l.b16 %v578
      %v682 = vunpack.c.l.b16 %v579
      %v683 = vunpack.c.l.b16 %v580
      %v684 = vunpack.c.l.b16 %v581
      %v685 = vunpack.c.l.b16 %v582
      %v686 = vunpack.c.l.b16 %v583
      %v687 = vunpack.c.l.b16 %v584
      %v688 = vunpack.c.l.b16 %v585
      %v689 = vunpack.c.l.b16 %v586
      %v690 = vunpack.c.l.b16 %v587
      %v691 = vunpack.c.l.b16 %v588
      %v692 = vunpack.c.l.b16 %v589
      %v693 = vunpack.c.l.b16 %v590
      %v694 = vpack.c.b16 %v647, %v646
      %v695 = vpack.c.b16 %v649, %v648
      %v696 = vpack.c.b16 %v651, %v650
      %v697 = vpack.c.b16 %v653, %v652
      %v698 = vpack.c.b16 %v655, %v654
      %v699 = vpack.c.b16 %v657, %v656
      %v700 = vpack.c.b16 %v659, %v658
      %v701 = vpack.c.b16 %v661, %v660
      %v702 = vpack.c.b16 %v663, %v662
      %v703 = vpack.c.b16 %v665, %v664
      %v704 = vpack.c.b16 %v667, %v666
      %v705 = vpack.c.b16 %v669, %v668
      %v706 = vpack.c.b16 %v671, %v670
      %v707 = vpack.c.b16 %v673, %v672
      %v708 = vpack.c.b16 %v675, %v674
      %v709 = vpack.c.b16 %v677, %v676
      %v710 = vpack.c.b16 %v679, %v678
      %v711 = vpack.c.b16 %v681, %v680
      %v712 = vpack.c.b16 %v683, %v682
      %v713 = vpack.c.b16 %v685, %v684
      %v714 = vpack.c.b16 %v687, %v686
      %v715 = vpack.c.b16 %v689, %v688
      %v716 = vpack.c.b16 %v691, %v690
      %v717 = vpack.c.b16 %v693, %v692
      %742 = vmatprep.subr.bf16.mxu0 0
      %743 = vmatpush1.bf16.msra.mxu0 %v701
      %744 = vmatprep.subr.bf16.mxu0 0
      %745 = vmatpush1.bf16.msra.mxu0 %v700
      %746 = vmatprep.subr.bf16.mxu0 0
      %747 = vmatpush1.bf16.msra.mxu0 %v699
      %748 = vmatprep.subr.bf16.mxu0 0
      %749 = vmatpush1.bf16.msra.mxu0 %v698
      %750 = vmatprep.subr.bf16.mxu0 0
      %751 = vmatpush1.bf16.msra.mxu0 %v697
      %752 = vmatprep.subr.bf16.mxu0 0
      %753 = vmatpush1.bf16.msra.mxu0 %v696
      %754 = vmatprep.subr.bf16.mxu0 0
      %755 = vmatpush1.bf16.msra.mxu0 %v695
      %756 = vmatprep.subr.bf16.mxu0 0
      %757 = vmatpush1.bf16.msra.mxu0 %v694
      %758 = vmatprep.subr.bf16.mxu0 0
      %759 = vmatpush2.bf16.msra.mxu0 %v709
      %760 = vmatprep.subr.bf16.mxu0 0
      %761 = vmatpush2.bf16.msra.mxu0 %v708
      %762 = vmatprep.subr.bf16.mxu0 0
      %763 = vmatpush2.bf16.msra.mxu0 %v707
      %764 = vmatprep.subr.bf16.mxu0 0
      %765 = vmatpush2.bf16.msra.mxu0 %v706
      %766 = vmatprep.subr.bf16.mxu0 0
      %767 = vmatpush2.bf16.msra.mxu0 %v705
      %768 = vmatprep.subr.bf16.mxu0 0
      %769 = vmatpush2.bf16.msra.mxu0 %v704
      %770 = vmatprep.subr.bf16.mxu0 0
      %771 = vmatpush2.bf16.msra.mxu0 %v703
      %772 = vmatprep.subr.bf16.mxu0 0
      %773 = vmatpush2.bf16.msra.mxu0 %v702
      %774 = vmatprep.mubr.bf16.mxu0 %v538
      %775 = vmatmul.mubr.bf16.gmra.mxu0 %v531
      %v776 = vpop.f32.mrf.mxu0
      %v777 = vadd.f32 %v596, %v776
      %v778 = vpop.f32.mrf.mxu0
      %v779 = vpop.f32.mrf.mxu0
      %v780 = vpop.f32.mrf.mxu0
      %781 = vdwg.mxu0
      %782 = vmatprep.subr.bf16.mxu0 0
      %783 = vmatpush1.bf16.msra.mxu0 %v717
      %784 = vmatprep.subr.bf16.mxu0 0
      %785 = vmatpush1.bf16.msra.mxu0 %v716
      %786 = vmatprep.subr.bf16.mxu0 0
      %787 = vmatpush1.bf16.msra.mxu0 %v715
      %788 = vmatprep.subr.bf16.mxu0 0
      %789 = vmatpush1.bf16.msra.mxu0 %v714
      %790 = vmatprep.subr.bf16.mxu0 0
      %791 = vmatpush1.bf16.msra.mxu0 %v713
      %792 = vmatprep.subr.bf16.mxu0 0
      %793 = vmatpush1.bf16.msra.mxu0 %v712
      %794 = vmatprep.subr.bf16.mxu0 0
      %795 = vmatpush1.bf16.msra.mxu0 %v711
      %796 = vmatprep.subr.bf16.mxu0 0
      %797 = vmatpush1.bf16.msra.mxu0 %v710
      %798 = vmatprep.subr.bf16.mxu0 0
      %799 = vmatpush2.bf16.msra.mxu0 0
      %800 = vmatprep.subr.bf16.mxu0 0
      %801 = vmatpush2.bf16.msra.mxu0 0
      %802 = vmatprep.subr.bf16.mxu0 0
      %803 = vmatpush2.bf16.msra.mxu0 0
      %804 = vmatprep.subr.bf16.mxu0 0
      %805 = vmatpush2.bf16.msra.mxu0 0
      %806 = vmatprep.subr.bf16.mxu0 0
      %807 = vmatpush2.bf16.msra.mxu0 0
      %808 = vmatprep.subr.bf16.mxu0 0
      %809 = vmatpush2.bf16.msra.mxu0 0
      %810 = vmatprep.subr.bf16.mxu0 0
      %811 = vmatpush2.bf16.msra.mxu0 0
      %812 = vmatprep.subr.bf16.mxu0 0
      %813 = vmatpush2.bf16.msra.mxu0 0
      %814 = vmatprep.mubr.bf16.mxu0 0
      %815 = vmatmul.mubr.bf16.gmra.mxu0 %v541
      %v816 = vpop.f32.mrf.mxu0
      %v817 = vadd.f32 %v777, %v816
      %v818 = vpop.f32.mrf.mxu0
      %v819 = vpop.f32.mrf.mxu0
      %v820 = vpop.f32.mrf.mxu0
      %821 = vdwg.mxu0
      %v822 = vmax.f32 %v817, 0.0
      %v823 = vpack.c.bf16 %v822, %v822
      %v824 = vld [vmem:[%s4] sm:$0xf]
      %v825 = vld [vmem:[%s4 + $0x4] sm:$0xf]
      %v826 = vld [vmem:[%s4 + $0x8] sm:$0xf]
      %v827 = vld [vmem:[%s4 + $0xc] sm:$0xf]
      %v828 = vld [vmem:[%s4 + $0x10] sm:$0xf]
      %v829 = vld [vmem:[%s4 + $0x14] sm:$0xf]
      %v830 = vld [vmem:[%s4 + $0x18] sm:$0xf]
      %v831 = vld [vmem:[%s4 + $0x1c] sm:$0xf]
      %v832 = vld [vmem:[%s4 + $0x20] sm:$0xf]
      %v833 = vld [vmem:[%s4 + $0x24] sm:$0xf]
      %v834 = vld [vmem:[%s4 + $0x28] sm:$0xf]
      %v835 = vld [vmem:[%s4 + $0x2c] sm:$0xf]
      %v836 = vld [vmem:[%s4 + $0x30] sm:$0xf]
      %v837 = vld [vmem:[%s4 + $0x34] sm:$0xf]
      %v838 = vld [vmem:[%s4 + $0x38] sm:$0xf]
      %v839 = vld [vmem:[%s4 + $0x3c] sm:$0xf]
      %v840 = vunpack.c.l.bf16 %v366
      %v841 = vld [vmem:[%s7] sm:$0x1]
      %v843 = vlaneseq
      %v844 = vshrl.u32 %v843, 7
      %v845 = vsub.s32 0, %v844
      %v846 = vrot.slane %v841, %v845
      %v864 = vunpack.c.l.b16 %v824
      %v865 = vunpack.c.l.b16 %v825
      %v866 = vunpack.c.l.b16 %v826
      %v867 = vunpack.c.l.b16 %v827
      %v868 = vunpack.c.l.b16 %v828
      %v869 = vunpack.c.l.b16 %v829
      %v870 = vunpack.c.l.b16 %v830
      %v871 = vunpack.c.l.b16 %v831
      %v872 = vunpack.c.l.b16 %v832
      %v873 = vunpack.c.l.b16 %v833
      %v874 = vunpack.c.l.b16 %v834
      %v875 = vunpack.c.l.b16 %v835
      %v876 = vunpack.c.l.b16 %v836
      %v877 = vunpack.c.l.b16 %v837
      %v878 = vunpack.c.l.b16 %v838
      %v879 = vunpack.c.l.b16 %v839
      %v880 = vpack.c.b16 %v865, %v864
      %v881 = vpack.c.b16 %v867, %v866
      %v882 = vpack.c.b16 %v869, %v868
      %v883 = vpack.c.b16 %v871, %v870
      %v884 = vpack.c.b16 %v873, %v872
      %v885 = vpack.c.b16 %v875, %v874
      %v886 = vpack.c.b16 %v877, %v876
      %v887 = vpack.c.b16 %v879, %v878
      %896 = vmatprep.subr.bf16.mxu0 0
      %897 = vmatpush1.bf16.msra.mxu0 %v887
      %898 = vmatprep.subr.bf16.mxu0 0
      %899 = vmatpush1.bf16.msra.mxu0 %v886
      %900 = vmatprep.subr.bf16.mxu0 0
      %901 = vmatpush1.bf16.msra.mxu0 %v885
      %902 = vmatprep.subr.bf16.mxu0 0
      %903 = vmatpush1.bf16.msra.mxu0 %v884
      %904 = vmatprep.subr.bf16.mxu0 0
      %905 = vmatpush1.bf16.msra.mxu0 %v883
      %906 = vmatprep.subr.bf16.mxu0 0
      %907 = vmatpush1.bf16.msra.mxu0 %v882
      %908 = vmatprep.subr.bf16.mxu0 0
      %909 = vmatpush1.bf16.msra.mxu0 %v881
      %910 = vmatprep.subr.bf16.mxu0 0
      %911 = vmatpush1.bf16.msra.mxu0 %v880
      %912 = vmatprep.subr.bf16.mxu0 0
      %913 = vmatpush2.bf16.msra.mxu0 0
      %914 = vmatprep.subr.bf16.mxu0 0
      %915 = vmatpush2.bf16.msra.mxu0 0
      %916 = vmatprep.subr.bf16.mxu0 0
      %917 = vmatpush2.bf16.msra.mxu0 0
      %918 = vmatprep.subr.bf16.mxu0 0
      %919 = vmatpush2.bf16.msra.mxu0 0
      %920 = vmatprep.subr.bf16.mxu0 0
      %921 = vmatpush2.bf16.msra.mxu0 0
      %922 = vmatprep.subr.bf16.mxu0 0
      %923 = vmatpush2.bf16.msra.mxu0 0
      %924 = vmatprep.subr.bf16.mxu0 0
      %925 = vmatpush2.bf16.msra.mxu0 0
      %926 = vmatprep.subr.bf16.mxu0 0
      %927 = vmatpush2.bf16.msra.mxu0 0
      %928 = vmatprep.mubr.bf16.mxu0 0
      %929 = vmatmul.mubr.bf16.gmra.mxu0 %v823
      %v930 = vpop.f32.mrf.mxu0
      %v931 = vadd.f32 %v846, %v930
      %v932 = vpop.f32.mrf.mxu0
      %v933 = vpop.f32.mrf.mxu0
      %v934 = vpop.f32.mrf.mxu0
      %935 = vdwg.mxu0
      %v936 = vadd.f32 %v931, %v840
      %v937 = vmax.f32 %v936, 0.0
      %938 = vst [vmem:[%s364] sm:$0xff] %v937
      %p939 = scmp.lt.s32.totalorder %s23, 1
      %s940 = scalar_select %p939, %s23, 1
      %p941 = scmp.lt.s32.totalorder %s24, 1
      %s942 = scalar_select %p941, %s24, 1
      %s943 = smul.addr %s940, 2
      %s944 = sadd.s32 %s942, %s943
      %s945 = smul.addr %s944, 8
      %s946 = scalar_lea.vmem %s8, %s945
      // Predicated region
      $region53: #{_bottleneck_impl.1} parent=51 // pred_check
        %p947 = pneg %p233
      $region54: #{_bottleneck_impl.1} parent=51 // pred_check_branch
        %949 = sbr.rel (%p947) target = $region56
      $region55: #{_bottleneck_impl.1} parent=51 // pred_region
        _
      $region56: #{_bottleneck_impl.1} parent=51 // pred_fallthru
        _
    $region52: #{_bottleneck_impl.1} parent=5 // pred_fallthru
      _
    %p950 = scmp.le.s32.totalorder 2, %s14
    // Predicated region
    $region57: #{_bottleneck_impl.1} parent=5 // pred_check
      %p951 = pneg %p950
    $region58: #{_bottleneck_impl.1} parent=5 // pred_check_branch
      %953 = sbr.rel (%p951) target = $region60
    $region59: #{_bottleneck_impl.1} parent=5 // pred_region
      %s954 = ssub.s32 %s14, 2
      // Predicated region
      $region61: #{_bottleneck_impl.1} parent=59 // pred_check
        %p955 = pneg %p239
      $region62: #{_bottleneck_impl.1} parent=59 // pred_check_branch
        %957 = sbr.rel (%p955) target = $region64
      $region63: #{_bottleneck_impl.1} parent=59 // pred_region
        %p958 = scmp.lt.s32.totalorder %s25, 1
        %s959 = scalar_select %p958, %s25, 1
        %p960 = scmp.lt.s32.totalorder %s26, 1
        %s961 = scalar_select %p960, %s26, 1
        %s962 = smul.addr %s959, 2
        %s963 = sadd.s32 %s961, %s962
        %s964 = smul.addr %s963, 8
        %s965 = scalar_lea.vmem %s8, %s964
      $region64: #{_bottleneck_impl.1} parent=59 // pred_fallthru
        _
    $region60: #{_bottleneck_impl.1} parent=5 // pred_fallthru
      _
  $region6: #{_bottleneck_impl.1} parent=0 // loop_footer
    %s18 = sadd.s32 1, %s14
  $region7: #{_bottleneck_impl.1} parent=0 // loop_footer_branch
    %13 = sbr.rel target = $region3
  $region8: #{_bottleneck_impl.1} parent=0 // loop_exit
    _

</llo_original>
